<compile_context>
chip_gen: v6e
topology: v6e:2x2x1
jax: 0.10.0
libtpu: 0.0.40
codegen_flags: <defaults>
</compile_context>

<pallas_src>
import jax
import jax.numpy as jnp
import numpy as np
from jax import lax
from jax.experimental import pallas as pl
from jax.experimental.pallas import tpu as pltpu

_EPS = 1e-6
_SQRT_HALF = 0.7071067811865476


# ----------------------------------------------------------------------------
# In-kernel helpers (only ops with clean Mosaic lowering: exp, rsqrt, cmp,
# select, mul/add/div, lane reductions, MXU dots).
# ----------------------------------------------------------------------------
def _erf_approx(v):
    # Abramowitz & Stegun 7.1.26, |error| <= 1.5e-7.  Keeps torch's *exact*
    # (erf-based) GELU semantics while using only exp + basic VPU ops.
    p = 0.3275911
    a1, a2, a3, a4, a5 = (0.254829592, -0.284496736, 1.421413741,
                          -1.453152027, 1.061405429)
    s = jnp.where(v >= 0.0, 1.0, -1.0)
    z = v * s                                   # |v|
    t = 1.0 / (1.0 + p * z)
    poly = t * (a1 + t * (a2 + t * (a3 + t * (a4 + t * a5))))
    return s * (1.0 - poly * jnp.exp(-z * z))


def _gelu_exact(v):
    return 0.5 * v * (1.0 + _erf_approx(v * _SQRT_HALF))


def _layer_norm(v, gamma, beta, eps):
    mu = jnp.mean(v, axis=-1, keepdims=True)
    d = v - mu
    var = jnp.mean(d * d, axis=-1, keepdims=True)
    return d * lax.rsqrt(var + eps) * gamma + beta


# ----------------------------------------------------------------------------
# Fused Mixer-block kernel: one (N, D) slab per grid step.
# ----------------------------------------------------------------------------
def _mixer_kernel(x_ref, g1_ref, b1_ref, g2_ref, b2_ref,
                  wt1_ref, bt1_ref, wt2_ref, bt2_ref,
                  wc1_ref, bc1_ref, wc2_ref, bc2_ref, o_ref):
    f32 = jnp.float32
    xv = x_ref[0].astype(f32)                                     # (N, D)

    # ---- token-mixing branch -------------------------------------------------
    y = _layer_norm(xv, g1_ref[...], b1_ref[...], _EPS)           # (N, D)
    # token MLP acts on y^T; compute in the transposed domain with standard
    # matmuls (no explicit transpose):
    #   hT[t, d]   = sum_n W1[t, n] * y[n, d] + b1[t]
    hT = jnp.dot(wt1_ref[...], y, preferred_element_type=f32) + bt1_ref[...]
    gT = _gelu_exact(hT)                                          # (T, D)
    #   tmix[n, d] = sum_t W2[n, t] * gT[t, d] + b2[n]
    tmix = jnp.dot(wt2_ref[...], gT, preferred_element_type=f32) + bt2_ref[...]
    x1 = xv + tmix                                                # residual

    # ---- channel-mixing branch -------------------------------------------------
    z = _layer_norm(x1, g2_ref[...], b2_ref[...], _EPS)           # (N, D)
    h = jnp.dot(z, wc1_ref[...], preferred_element_type=f32) + bc1_ref[...]
    h = _gelu_exact(h)                                            # (N, C)
    cmix = jnp.dot(h, wc2_ref[...], preferred_element_type=f32) + bc2_ref[...]

    # Dropout(drop=0.0) -> identity.
    o_ref[0] = (x1 + cmix).astype(o_ref.dtype)


# ----------------------------------------------------------------------------
# Wrapper reproducing Mixer.forward
# ----------------------------------------------------------------------------
def mixer_forward(x, params):
    """x: (B, N, D).  params hold torch-layout weights (see __main__)."""
    B, N, D = x.shape
    wt1 = params["tok_fc1_w"]                     # (T, N)  torch layout
    wt2 = params["tok_fc2_w"]                     # (N, T)  torch layout
    T = wt1.shape[0]
    wc1 = jnp.transpose(params["ch_fc1_w"])       # (D, C)  pre-transposed once
    wc2 = jnp.transpose(params["ch_fc2_w"])       # (C, D)
    C = wc1.shape[1]

    g1 = params["norm1_w"].reshape(1, D)
    b1 = params["norm1_b"].reshape(1, D)
    g2 = params["norm2_w"].reshape(1, D)
    b2 = params["norm2_b"].reshape(1, D)
    bt1 = params["tok_fc1_b"].reshape(T, 1)       # column bias (transposed domain)
    bt2 = params["tok_fc2_b"].reshape(N, 1)
    bc1 = params["ch_fc1_b"].reshape(1, C)
    bc2 = params["ch_fc2_b"].reshape(1, D)

    def full(shape):
        return pl.BlockSpec(shape, lambda b, _s=shape: (0,) * len(_s))

    in_specs = [
        pl.BlockSpec((1, N, D), lambda b: (b, 0, 0)),   # x: one batch slab / step
        full((1, D)), full((1, D)), full((1, D)), full((1, D)),
        full((T, N)), full((T, 1)), full((N, T)), full((N, 1)),
        full((D, C)), full((1, C)), full((C, D)), full((1, D)),
    ]
    out_specs = pl.BlockSpec((1, N, D), lambda b: (b, 0, 0))

    # Advisory cost estimate for XLA's scheduler.
    matmul_flops = 4 * B * N * D * (T + C)
    cost = pl.CostEstimate(
        flops=int(matmul_flops + 16 * B * N * D),
        transcendentals=int(B * (T * D + N * C) + 2 * B * N),
        bytes_accessed=int(4 * (2 * B * N * D + 2 * T * N + 2 * D * C
                                + T + N + 2 * C + 5 * D)),
    )

    # Explicit scoped-VMEM budget: double-buffered x/out slabs + resident
    # weights + intermediate headroom (well under v7x's 64 MiB physical).
    block_bytes = 4 * (4 * N * D                    # x + out, double-buffered
                       + 2 * T * N + 2 * D * C      # weights (resident)
                       + T + N + 2 * C + 5 * D      # biases + norm params
                       + T * D + N * C + 3 * N * D) # intermediates
    vmem_limit = int(min(96 * 2**20, max(16 * 2**20, 4 * block_bytes)))

    return pl.pallas_call(
        _mixer_kernel,
        out_shape=jax.ShapeDtypeStruct((B, N, D), x.dtype),
        grid_spec=pltpu.PrefetchScalarGridSpec(
            num_scalar_prefetch=0,
            grid=(B,),
            in_specs=in_specs,
            out_specs=out_specs,
        ),
        compiler_params=pltpu.CompilerParams(
            dimension_semantics=("parallel",),
            vmem_limit_bytes=vmem_limit,
        ),
        cost_estimate=cost,
    )(x, g1, b1, g2, b2, wt1, bt1, wt2, bt2, wc1, bc1, wc2, bc2)


# ----------------------------------------------------------------------------
# Pure-JAX reference (matches torch Mixer.forward, exact erf GELU)
# ----------------------------------------------------------------------------
def mixer_reference(x, params, eps=_EPS):
    hp = lax.Precision.HIGHEST

    def ln(v, w, b):
        mu = v.mean(-1, keepdims=True)
        var = ((v - mu) ** 2).mean(-1, keepdims=True)
        return (v - mu) / jnp.sqrt(var + eps) * w + b

    def gelu(v):
        return 0.5 * v * (1.0 + jax.scipy.special.erf(v * np.float32(_SQRT_HALF)))

    y = ln(x, params["norm1_w"], params["norm1_b"])
    yt = jnp.swapaxes(y, 1, 2)                                       # (B, D, N)
    h = jnp.einsum("bdn,tn->bdt", yt, params["tok_fc1_w"], precision=hp)
    h = gelu(h + params["tok_fc1_b"])
    t = jnp.einsum("bdt,nt->bdn", h, params["tok_fc2_w"], precision=hp)
    t = t + params["tok_fc2_b"]
    x1 = x + jnp.swapaxes(t, 1, 2)
    z = ln(x1, params["norm2_w"], params["norm2_b"])
    h2 = jnp.einsum("bnd,cd->bnc", z, params["ch_fc1_w"], precision=hp)
    h2 = gelu(h2 + params["ch_fc1_b"])
    c = jnp.einsum("bnc,dc->bnd", h2, params["ch_fc2_w"], precision=hp)
    c = c + params["ch_fc2_b"]
    return x1 + c


# ----------------------------------------------------------------------------
# Demo / check
# ----------------------------------------------------------------------------
if __name__ == "__main__":
    # Small but lane-dense shapes: batch=2, patches(N)=8, dim=128,
    # token_dim=128, channel_dim=256.
    B, N, D = 2, 8, 128
    T, C = 128, 256

    key = jax.random.PRNGKey(0)
    ks = jax.random.split(key, 13)
    f32 = jnp.float32

    x = jax.random.normal(ks[0], (B, N, D), dtype=f32)
    params = dict(
        norm1_w=1.0 + 0.1 * jax.random.normal(ks[1], (D,), f32),
        norm1_b=0.1 * jax.random.normal(ks[2], (D,), f32),
        norm2_w=1.0 + 0.1 * jax.random.normal(ks[3], (D,), f32),
        norm2_b=0.1 * jax.random.normal(ks[4], (D,), f32),
        tok_fc1_w=0.1 * jax.random.normal(ks[5], (T, N), f32),   # Linear(patch, token_dim)
        tok_fc1_b=0.1 * jax.random.normal(ks[6], (T,), f32),
        tok_fc2_w=0.1 * jax.random.normal(ks[7], (N, T), f32),   # Linear(token_dim, patch)
        tok_fc2_b=0.1 * jax.random.normal(ks[8], (N,), f32),
        ch_fc1_w=0.1 * jax.random.normal(ks[9], (C, D), f32),    # Linear(dim, channel_dim)
        ch_fc1_b=0.1 * jax.random.normal(ks[10], (C,), f32),
        ch_fc2_w=0.1 * jax.random.normal(ks[11], (D, C), f32),   # Linear(channel_dim, dim)
        ch_fc2_b=0.1 * jax.random.normal(ks[12], (D,), f32),
    )

    out = jax.jit(mixer_forward)(x, params)
    out = jax.block_until_ready(out)
    assert out.shape == (B, N, D)

    ref = jax.block_until_ready(mixer_reference(x, params))
    np.testing.assert_allclose(np.asarray(out), np.asarray(ref),
                               rtol=2e-3, atol=2e-3)
    print("KERNEL_OK")
</pallas_src>

<mosaic_0001>
module attributes {stable_mosaic.version = 11 : i64} {
  func.func @_mixer_kernel(%arg0: i32, %arg1: memref<1x8x128xf32, #tpu.memory_space<vmem>>, %arg2: memref<1x128xf32, #tpu.memory_space<vmem>>, %arg3: memref<1x128xf32, #tpu.memory_space<vmem>>, %arg4: memref<1x128xf32, #tpu.memory_space<vmem>>, %arg5: memref<1x128xf32, #tpu.memory_space<vmem>>, %arg6: memref<128x8xf32, #tpu.memory_space<vmem>>, %arg7: memref<128x1xf32, #tpu.memory_space<vmem>>, %arg8: memref<8x128xf32, #tpu.memory_space<vmem>>, %arg9: memref<8x1xf32, #tpu.memory_space<vmem>>, %arg10: memref<128x256xf32, #tpu.memory_space<vmem>>, %arg11: memref<1x256xf32, #tpu.memory_space<vmem>>, %arg12: memref<256x128xf32, #tpu.memory_space<vmem>>, %arg13: memref<1x128xf32, #tpu.memory_space<vmem>>, %arg14: memref<1x8x128xf32, #tpu.memory_space<vmem>>) attributes {dimension_semantics = [#tpu.dimension_semantics<parallel>], iteration_bounds = array<i64: 2>, scalar_prefetch = 0 : i64, scratch_operands = 0 : i64, tpu.core_type = #tpu.core_type<tc>, window_params = [{transform_indices = @transform_0, window_bounds = array<i64: 1, 8, 128>}, {pipeline_mode = #tpu.pipeline_mode<synchronous>, transform_indices = @transform_1, window_bounds = array<i64: 1, 128>}, {pipeline_mode = #tpu.pipeline_mode<synchronous>, transform_indices = @transform_2, window_bounds = array<i64: 1, 128>}, {pipeline_mode = #tpu.pipeline_mode<synchronous>, transform_indices = @transform_3, window_bounds = array<i64: 1, 128>}, {pipeline_mode = #tpu.pipeline_mode<synchronous>, transform_indices = @transform_4, window_bounds = array<i64: 1, 128>}, {pipeline_mode = #tpu.pipeline_mode<synchronous>, transform_indices = @transform_5, window_bounds = array<i64: 128, 8>}, {pipeline_mode = #tpu.pipeline_mode<synchronous>, transform_indices = @transform_6, window_bounds = array<i64: 128, 1>}, {pipeline_mode = #tpu.pipeline_mode<synchronous>, transform_indices = @transform_7, window_bounds = array<i64: 8, 128>}, {pipeline_mode = #tpu.pipeline_mode<synchronous>, transform_indices = @transform_8, window_bounds = array<i64: 8, 1>}, {pipeline_mode = #tpu.pipeline_mode<synchronous>, transform_indices = @transform_9, window_bounds = array<i64: 128, 256>}, {pipeline_mode = #tpu.pipeline_mode<synchronous>, transform_indices = @transform_10, window_bounds = array<i64: 1, 256>}, {pipeline_mode = #tpu.pipeline_mode<synchronous>, transform_indices = @transform_11, window_bounds = array<i64: 256, 128>}, {pipeline_mode = #tpu.pipeline_mode<synchronous>, transform_indices = @transform_12, window_bounds = array<i64: 1, 128>}, {transform_indices = @transform_13, window_bounds = array<i64: 1, 8, 128>}]} {
    %c0 = arith.constant 0 : index
    %c0_0 = arith.constant 0 : index
    %c0_1 = arith.constant 0 : index
    %0 = vector.load %arg1[%c0, %c0_0, %c0_1] : memref<1x8x128xf32, #tpu.memory_space<vmem>>, vector<1x8x128xf32>
    %1 = vector.shape_cast %0 : vector<1x8x128xf32> to vector<8x128xf32>
    %c0_2 = arith.constant 0 : index
    %c0_3 = arith.constant 0 : index
    %2 = vector.load %arg2[%c0_2, %c0_3] : memref<1x128xf32, #tpu.memory_space<vmem>>, vector<1x128xf32>
    %c0_4 = arith.constant 0 : index
    %c0_5 = arith.constant 0 : index
    %3 = vector.load %arg3[%c0_4, %c0_5] : memref<1x128xf32, #tpu.memory_space<vmem>>, vector<1x128xf32>
    %cst = arith.constant dense<0.000000e+00> : vector<8xf32>
    %4 = vector.multi_reduction <add>, %1, %cst [1] : vector<8x128xf32> to vector<8xf32>
    %5 = vector.shape_cast %4 : vector<8xf32> to vector<8x1xf32>
    %cst_6 = arith.constant 1.280000e+02 : f32
    %6 = vector.broadcast %cst_6 : f32 to vector<8x1xf32>
    %7 = arith.divf %5, %6 : vector<8x1xf32>
    %8 = vector.broadcast %7 : vector<8x1xf32> to vector<8x128xf32>
    %9 = arith.subf %1, %8 : vector<8x128xf32>
    %10 = arith.mulf %9, %9 : vector<8x128xf32>
    %cst_7 = arith.constant dense<0.000000e+00> : vector<8xf32>
    %11 = vector.multi_reduction <add>, %10, %cst_7 [1] : vector<8x128xf32> to vector<8xf32>
    %12 = vector.shape_cast %11 : vector<8xf32> to vector<8x1xf32>
    %cst_8 = arith.constant 1.280000e+02 : f32
    %13 = vector.broadcast %cst_8 : f32 to vector<8x1xf32>
    %14 = arith.divf %12, %13 : vector<8x1xf32>
    %cst_9 = arith.constant 9.99999997E-7 : f32
    %15 = vector.broadcast %cst_9 : f32 to vector<8x1xf32>
    %16 = arith.addf %14, %15 : vector<8x1xf32>
    %17 = math.rsqrt %16 : vector<8x1xf32>
    %18 = vector.broadcast %17 : vector<8x1xf32> to vector<8x128xf32>
    %19 = arith.mulf %9, %18 : vector<8x128xf32>
    %20 = vector.broadcast %2 : vector<1x128xf32> to vector<8x128xf32>
    %21 = arith.mulf %19, %20 : vector<8x128xf32>
    %22 = vector.broadcast %3 : vector<1x128xf32> to vector<8x128xf32>
    %23 = arith.addf %21, %22 : vector<8x128xf32>
    %c0_10 = arith.constant 0 : index
    %c0_11 = arith.constant 0 : index
    %24 = vector.load %arg6[%c0_10, %c0_11] : memref<128x8xf32, #tpu.memory_space<vmem>>, vector<128x8xf32>
    %cst_12 = arith.constant dense<0.000000e+00> : vector<128x128xf32>
    %25 = tpu.matmul %24, %23, %cst_12 {dimension_numbers = #tpu.dot_dimension_numbers<[1], [0], [0], [1], [0, 0, 1, 1], [], []>} : vector<128x8xf32>, vector<8x128xf32>, vector<128x128xf32> -> vector<128x128xf32>
    %c0_13 = arith.constant 0 : index
    %c0_14 = arith.constant 0 : index
    %26 = vector.load %arg7[%c0_13, %c0_14] : memref<128x1xf32, #tpu.memory_space<vmem>>, vector<128x1xf32>
    %27 = vector.broadcast %26 : vector<128x1xf32> to vector<128x128xf32>
    %28 = arith.addf %25, %27 : vector<128x128xf32>
    %cst_15 = arith.constant 5.000000e-01 : f32
    %29 = vector.broadcast %cst_15 : f32 to vector<128x128xf32>
    %30 = arith.mulf %29, %28 : vector<128x128xf32>
    %cst_16 = arith.constant 0.707106769 : f32
    %31 = vector.broadcast %cst_16 : f32 to vector<128x128xf32>
    %32 = arith.mulf %28, %31 : vector<128x128xf32>
    %cst_17 = arith.constant 0.000000e+00 : f32
    %33 = vector.broadcast %cst_17 : f32 to vector<128x128xf32>
    %34 = arith.cmpf oge, %32, %33 : vector<128x128xf32>
    %cst_18 = arith.constant 1.000000e+00 : f32
    %cst_19 = arith.constant -1.000000e+00 : f32
    %35 = vector.broadcast %cst_18 : f32 to vector<128x128xf32>
    %36 = vector.broadcast %cst_19 : f32 to vector<128x128xf32>
    %37 = arith.select %34, %35, %36 : vector<128x128xi1>, vector<128x128xf32>
    %38 = arith.mulf %32, %37 : vector<128x128xf32>
    %cst_20 = arith.constant 0.327591091 : f32
    %39 = vector.broadcast %cst_20 : f32 to vector<128x128xf32>
    %40 = arith.mulf %39, %38 : vector<128x128xf32>
    %cst_21 = arith.constant 1.000000e+00 : f32
    %41 = vector.broadcast %cst_21 : f32 to vector<128x128xf32>
    %42 = arith.addf %41, %40 : vector<128x128xf32>
    %cst_22 = arith.constant 1.000000e+00 : f32
    %43 = vector.broadcast %cst_22 : f32 to vector<128x128xf32>
    %44 = arith.divf %43, %42 : vector<128x128xf32>
    %cst_23 = arith.constant 1.06140542 : f32
    %45 = vector.broadcast %cst_23 : f32 to vector<128x128xf32>
    %46 = arith.mulf %44, %45 : vector<128x128xf32>
    %cst_24 = arith.constant -1.45315206 : f32
    %47 = vector.broadcast %cst_24 : f32 to vector<128x128xf32>
    %48 = arith.addf %47, %46 : vector<128x128xf32>
    %49 = arith.mulf %44, %48 : vector<128x128xf32>
    %cst_25 = arith.constant 1.42141378 : f32
    %50 = vector.broadcast %cst_25 : f32 to vector<128x128xf32>
    %51 = arith.addf %50, %49 : vector<128x128xf32>
    %52 = arith.mulf %44, %51 : vector<128x128xf32>
    %cst_26 = arith.constant -0.284496725 : f32
    %53 = vector.broadcast %cst_26 : f32 to vector<128x128xf32>
    %54 = arith.addf %53, %52 : vector<128x128xf32>
    %55 = arith.mulf %44, %54 : vector<128x128xf32>
    %cst_27 = arith.constant 0.254829586 : f32
    %56 = vector.broadcast %cst_27 : f32 to vector<128x128xf32>
    %57 = arith.addf %56, %55 : vector<128x128xf32>
    %58 = arith.mulf %44, %57 : vector<128x128xf32>
    %cst_28 = arith.constant 0.000000e+00 : f32
    %59 = vector.broadcast %cst_28 : f32 to vector<128x128xf32>
    %60 = arith.subf %59, %38 : vector<128x128xf32>
    %61 = arith.mulf %60, %38 : vector<128x128xf32>
    %62 = math.exp %61 : vector<128x128xf32>
    %63 = arith.mulf %58, %62 : vector<128x128xf32>
    %cst_29 = arith.constant 1.000000e+00 : f32
    %64 = vector.broadcast %cst_29 : f32 to vector<128x128xf32>
    %65 = arith.subf %64, %63 : vector<128x128xf32>
    %66 = arith.mulf %37, %65 : vector<128x128xf32>
    %cst_30 = arith.constant 1.000000e+00 : f32
    %67 = vector.broadcast %cst_30 : f32 to vector<128x128xf32>
    %68 = arith.addf %67, %66 : vector<128x128xf32>
    %69 = arith.mulf %30, %68 : vector<128x128xf32>
    %c0_31 = arith.constant 0 : index
    %c0_32 = arith.constant 0 : index
    %70 = vector.load %arg8[%c0_31, %c0_32] : memref<8x128xf32, #tpu.memory_space<vmem>>, vector<8x128xf32>
    %cst_33 = arith.constant dense<0.000000e+00> : vector<8x128xf32>
    %71 = tpu.matmul %70, %69, %cst_33 {dimension_numbers = #tpu.dot_dimension_numbers<[1], [0], [0], [1], [0, 0, 1, 1], [], []>} : vector<8x128xf32>, vector<128x128xf32>, vector<8x128xf32> -> vector<8x128xf32>
    %c0_34 = arith.constant 0 : index
    %c0_35 = arith.constant 0 : index
    %72 = vector.load %arg9[%c0_34, %c0_35] : memref<8x1xf32, #tpu.memory_space<vmem>>, vector<8x1xf32>
    %73 = vector.broadcast %72 : vector<8x1xf32> to vector<8x128xf32>
    %74 = arith.addf %71, %73 : vector<8x128xf32>
    %75 = arith.addf %1, %74 : vector<8x128xf32>
    %c0_36 = arith.constant 0 : index
    %c0_37 = arith.constant 0 : index
    %76 = vector.load %arg4[%c0_36, %c0_37] : memref<1x128xf32, #tpu.memory_space<vmem>>, vector<1x128xf32>
    %c0_38 = arith.constant 0 : index
    %c0_39 = arith.constant 0 : index
    %77 = vector.load %arg5[%c0_38, %c0_39] : memref<1x128xf32, #tpu.memory_space<vmem>>, vector<1x128xf32>
    %cst_40 = arith.constant dense<0.000000e+00> : vector<8xf32>
    %78 = vector.multi_reduction <add>, %75, %cst_40 [1] : vector<8x128xf32> to vector<8xf32>
    %79 = vector.shape_cast %78 : vector<8xf32> to vector<8x1xf32>
    %cst_41 = arith.constant 1.280000e+02 : f32
    %80 = vector.broadcast %cst_41 : f32 to vector<8x1xf32>
    %81 = arith.divf %79, %80 : vector<8x1xf32>
    %82 = vector.broadcast %81 : vector<8x1xf32> to vector<8x128xf32>
    %83 = arith.subf %75, %82 : vector<8x128xf32>
    %84 = arith.mulf %83, %83 : vector<8x128xf32>
    %cst_42 = arith.constant dense<0.000000e+00> : vector<8xf32>
    %85 = vector.multi_reduction <add>, %84, %cst_42 [1] : vector<8x128xf32> to vector<8xf32>
    %86 = vector.shape_cast %85 : vector<8xf32> to vector<8x1xf32>
    %cst_43 = arith.constant 1.280000e+02 : f32
    %87 = vector.broadcast %cst_43 : f32 to vector<8x1xf32>
    %88 = arith.divf %86, %87 : vector<8x1xf32>
    %cst_44 = arith.constant 9.99999997E-7 : f32
    %89 = vector.broadcast %cst_44 : f32 to vector<8x1xf32>
    %90 = arith.addf %88, %89 : vector<8x1xf32>
    %91 = math.rsqrt %90 : vector<8x1xf32>
    %92 = vector.broadcast %91 : vector<8x1xf32> to vector<8x128xf32>
    %93 = arith.mulf %83, %92 : vector<8x128xf32>
    %94 = vector.broadcast %76 : vector<1x128xf32> to vector<8x128xf32>
    %95 = arith.mulf %93, %94 : vector<8x128xf32>
    %96 = vector.broadcast %77 : vector<1x128xf32> to vector<8x128xf32>
    %97 = arith.addf %95, %96 : vector<8x128xf32>
    %c0_45 = arith.constant 0 : index
    %c0_46 = arith.constant 0 : index
    %98 = vector.load %arg10[%c0_45, %c0_46] : memref<128x256xf32, #tpu.memory_space<vmem>>, vector<128x256xf32>
    %cst_47 = arith.constant dense<0.000000e+00> : vector<8x256xf32>
    %99 = tpu.matmul %97, %98, %cst_47 {dimension_numbers = #tpu.dot_dimension_numbers<[1], [0], [0], [1], [0, 0, 1, 1], [], []>} : vector<8x128xf32>, vector<128x256xf32>, vector<8x256xf32> -> vector<8x256xf32>
    %c0_48 = arith.constant 0 : index
    %c0_49 = arith.constant 0 : index
    %100 = vector.load %arg11[%c0_48, %c0_49] : memref<1x256xf32, #tpu.memory_space<vmem>>, vector<1x256xf32>
    %101 = vector.broadcast %100 : vector<1x256xf32> to vector<8x256xf32>
    %102 = arith.addf %99, %101 : vector<8x256xf32>
    %cst_50 = arith.constant 5.000000e-01 : f32
    %103 = vector.broadcast %cst_50 : f32 to vector<8x256xf32>
    %104 = arith.mulf %103, %102 : vector<8x256xf32>
    %cst_51 = arith.constant 0.707106769 : f32
    %105 = vector.broadcast %cst_51 : f32 to vector<8x256xf32>
    %106 = arith.mulf %102, %105 : vector<8x256xf32>
    %cst_52 = arith.constant 0.000000e+00 : f32
    %107 = vector.broadcast %cst_52 : f32 to vector<8x256xf32>
    %108 = arith.cmpf oge, %106, %107 : vector<8x256xf32>
    %cst_53 = arith.constant 1.000000e+00 : f32
    %cst_54 = arith.constant -1.000000e+00 : f32
    %109 = vector.broadcast %cst_53 : f32 to vector<8x256xf32>
    %110 = vector.broadcast %cst_54 : f32 to vector<8x256xf32>
    %111 = arith.select %108, %109, %110 : vector<8x256xi1>, vector<8x256xf32>
    %112 = arith.mulf %106, %111 : vector<8x256xf32>
    %cst_55 = arith.constant 0.327591091 : f32
    %113 = vector.broadcast %cst_55 : f32 to vector<8x256xf32>
    %114 = arith.mulf %113, %112 : vector<8x256xf32>
    %cst_56 = arith.constant 1.000000e+00 : f32
    %115 = vector.broadcast %cst_56 : f32 to vector<8x256xf32>
    %116 = arith.addf %115, %114 : vector<8x256xf32>
    %cst_57 = arith.constant 1.000000e+00 : f32
    %117 = vector.broadcast %cst_57 : f32 to vector<8x256xf32>
    %118 = arith.divf %117, %116 : vector<8x256xf32>
    %cst_58 = arith.constant 1.06140542 : f32
    %119 = vector.broadcast %cst_58 : f32 to vector<8x256xf32>
    %120 = arith.mulf %118, %119 : vector<8x256xf32>
    %cst_59 = arith.constant -1.45315206 : f32
    %121 = vector.broadcast %cst_59 : f32 to vector<8x256xf32>
    %122 = arith.addf %121, %120 : vector<8x256xf32>
    %123 = arith.mulf %118, %122 : vector<8x256xf32>
    %cst_60 = arith.constant 1.42141378 : f32
    %124 = vector.broadcast %cst_60 : f32 to vector<8x256xf32>
    %125 = arith.addf %124, %123 : vector<8x256xf32>
    %126 = arith.mulf %118, %125 : vector<8x256xf32>
    %cst_61 = arith.constant -0.284496725 : f32
    %127 = vector.broadcast %cst_61 : f32 to vector<8x256xf32>
    %128 = arith.addf %127, %126 : vector<8x256xf32>
    %129 = arith.mulf %118, %128 : vector<8x256xf32>
    %cst_62 = arith.constant 0.254829586 : f32
    %130 = vector.broadcast %cst_62 : f32 to vector<8x256xf32>
    %131 = arith.addf %130, %129 : vector<8x256xf32>
    %132 = arith.mulf %118, %131 : vector<8x256xf32>
    %cst_63 = arith.constant 0.000000e+00 : f32
    %133 = vector.broadcast %cst_63 : f32 to vector<8x256xf32>
    %134 = arith.subf %133, %112 : vector<8x256xf32>
    %135 = arith.mulf %134, %112 : vector<8x256xf32>
    %136 = math.exp %135 : vector<8x256xf32>
    %137 = arith.mulf %132, %136 : vector<8x256xf32>
    %cst_64 = arith.constant 1.000000e+00 : f32
    %138 = vector.broadcast %cst_64 : f32 to vector<8x256xf32>
    %139 = arith.subf %138, %137 : vector<8x256xf32>
    %140 = arith.mulf %111, %139 : vector<8x256xf32>
    %cst_65 = arith.constant 1.000000e+00 : f32
    %141 = vector.broadcast %cst_65 : f32 to vector<8x256xf32>
    %142 = arith.addf %141, %140 : vector<8x256xf32>
    %143 = arith.mulf %104, %142 : vector<8x256xf32>
    %c0_66 = arith.constant 0 : index
    %c0_67 = arith.constant 0 : index
    %144 = vector.load %arg12[%c0_66, %c0_67] : memref<256x128xf32, #tpu.memory_space<vmem>>, vector<256x128xf32>
    %cst_68 = arith.constant dense<0.000000e+00> : vector<8x128xf32>
    %145 = tpu.matmul %143, %144, %cst_68 {dimension_numbers = #tpu.dot_dimension_numbers<[1], [0], [0], [1], [0, 0, 1, 1], [], []>} : vector<8x256xf32>, vector<256x128xf32>, vector<8x128xf32> -> vector<8x128xf32>
    %c0_69 = arith.constant 0 : index
    %c0_70 = arith.constant 0 : index
    %146 = vector.load %arg13[%c0_69, %c0_70] : memref<1x128xf32, #tpu.memory_space<vmem>>, vector<1x128xf32>
    %147 = vector.broadcast %146 : vector<1x128xf32> to vector<8x128xf32>
    %148 = arith.addf %145, %147 : vector<8x128xf32>
    %149 = arith.addf %75, %148 : vector<8x128xf32>
    %c0_71 = arith.constant 0 : index
    %c0_72 = arith.constant 0 : index
    %c0_73 = arith.constant 0 : index
    %150 = vector.load %arg14[%c0_71, %c0_72, %c0_73] : memref<1x8x128xf32, #tpu.memory_space<vmem>>, vector<1x8x128xf32>
    %151 = vector.shape_cast %150 : vector<1x8x128xf32> to vector<8x128xf32>
    %152 = vector.shape_cast %149 : vector<8x128xf32> to vector<1x8x128xf32>
    tpu.vector_store %arg14[%c0_71, %c0_72, %c0_73], %152 {strides = array<i32>} : memref<1x8x128xf32, #tpu.memory_space<vmem>>, vector<1x8x128xf32>,
    return
  }
  func.func @transform_0(%arg0: i32) -> (i32, i32, i32) {
    %c0_i32 = arith.constant 0 : i32
    %c0_i32_0 = arith.constant 0 : i32
    %c0_i32_1 = arith.constant 0 : i32
    return %arg0, %c0_i32, %c0_i32_0 : i32, i32, i32
  }
  func.func @transform_1(%arg0: i32) -> (i32, i32) {
    %c0_i32 = arith.constant 0 : i32
    %c0_i32_0 = arith.constant 0 : i32
    %c0_i32_1 = arith.constant 0 : i32
    return %c0_i32, %c0_i32_0 : i32, i32
  }
  func.func @transform_2(%arg0: i32) -> (i32, i32) {
    %c0_i32 = arith.constant 0 : i32
    %c0_i32_0 = arith.constant 0 : i32
    %c0_i32_1 = arith.constant 0 : i32
    return %c0_i32, %c0_i32_0 : i32, i32
  }
  func.func @transform_3(%arg0: i32) -> (i32, i32) {
    %c0_i32 = arith.constant 0 : i32
    %c0_i32_0 = arith.constant 0 : i32
    %c0_i32_1 = arith.constant 0 : i32
    return %c0_i32, %c0_i32_0 : i32, i32
  }
  func.func @transform_4(%arg0: i32) -> (i32, i32) {
    %c0_i32 = arith.constant 0 : i32
    %c0_i32_0 = arith.constant 0 : i32
    %c0_i32_1 = arith.constant 0 : i32
    return %c0_i32, %c0_i32_0 : i32, i32
  }
  func.func @transform_5(%arg0: i32) -> (i32, i32) {
    %c0_i32 = arith.constant 0 : i32
    %c0_i32_0 = arith.constant 0 : i32
    %c0_i32_1 = arith.constant 0 : i32
    return %c0_i32, %c0_i32_0 : i32, i32
  }
  func.func @transform_6(%arg0: i32) -> (i32, i32) {
    %c0_i32 = arith.constant 0 : i32
    %c0_i32_0 = arith.constant 0 : i32
    %c0_i32_1 = arith.constant 0 : i32
    return %c0_i32, %c0_i32_0 : i32, i32
  }
  func.func @transform_7(%arg0: i32) -> (i32, i32) {
    %c0_i32 = arith.constant 0 : i32
    %c0_i32_0 = arith.constant 0 : i32
    %c0_i32_1 = arith.constant 0 : i32
    return %c0_i32, %c0_i32_0 : i32, i32
  }
  func.func @transform_8(%arg0: i32) -> (i32, i32) {
    %c0_i32 = arith.constant 0 : i32
    %c0_i32_0 = arith.constant 0 : i32
    %c0_i32_1 = arith.constant 0 : i32
    return %c0_i32, %c0_i32_0 : i32, i32
  }
  func.func @transform_9(%arg0: i32) -> (i32, i32) {
    %c0_i32 = arith.constant 0 : i32
    %c0_i32_0 = arith.constant 0 : i32
    %c0_i32_1 = arith.constant 0 : i32
    return %c0_i32, %c0_i32_0 : i32, i32
  }
  func.func @transform_10(%arg0: i32) -> (i32, i32) {
    %c0_i32 = arith.constant 0 : i32
    %c0_i32_0 = arith.constant 0 : i32
    %c0_i32_1 = arith.constant 0 : i32
    return %c0_i32, %c0_i32_0 : i32, i32
  }
  func.func @transform_11(%arg0: i32) -> (i32, i32) {
    %c0_i32 = arith.constant 0 : i32
    %c0_i32_0 = arith.constant 0 : i32
    %c0_i32_1 = arith.constant 0 : i32
    return %c0_i32, %c0_i32_0 : i32, i32
  }
  func.func @transform_12(%arg0: i32) -> (i32, i32) {
    %c0_i32 = arith.constant 0 : i32
    %c0_i32_0 = arith.constant 0 : i32
    %c0_i32_1 = arith.constant 0 : i32
    return %c0_i32, %c0_i32_0 : i32, i32
  }
  func.func @transform_13(%arg0: i32) -> (i32, i32, i32) {
    %c0_i32 = arith.constant 0 : i32
    %c0_i32_0 = arith.constant 0 : i32
    %c0_i32_1 = arith.constant 0 : i32
    return %arg0, %c0_i32, %c0_i32_0 : i32, i32, i32
  }
}

</mosaic_0001>

<llo_original>
// kernel: mixer_forward.1
$region0: #{mixer_forward.1}
  #allocation0 [shape = 'u32[]', space=smem, size = 0x4, offset = 0x4, fixed_abs, tag = 'smem constant byte address 0x4 - core index']
  #allocation1 [shape = 'u32[144,128]{1,0:T(1,128)}', space=vmem, size = 0x12000, scoped, tag = 'internal scratch']
  %s0 = inlined_call_operand.vmem [shape: f32[2,8,128], index: 0, kind: input, shape index: {}]
  %s1 = inlined_call_operand.vmem [shape: f32[1,128], index: 1, kind: input, shape index: {}]
  %s2 = inlined_call_operand.vmem [shape: f32[1,128], index: 2, kind: input, shape index: {}]
  %s3 = inlined_call_operand.vmem [shape: f32[1,128], index: 3, kind: input, shape index: {}]
  %s4 = inlined_call_operand.vmem [shape: f32[1,128], index: 4, kind: input, shape index: {}]
  %s5 = inlined_call_operand.vmem [shape: f32[128,8], index: 5, kind: input, shape index: {}]
  %s6 = inlined_call_operand.vmem [shape: f32[128,1], index: 6, kind: input, shape index: {}]
  %s7 = inlined_call_operand.vmem [shape: f32[8,128], index: 7, kind: input, shape index: {}]
  %s8 = inlined_call_operand.vmem [shape: f32[8,1], index: 8, kind: input, shape index: {}]
  %s9 = inlined_call_operand.vmem [shape: f32[128,256], index: 9, kind: input, shape index: {}]
  %s10 = inlined_call_operand.vmem [shape: f32[1,256], index: 10, kind: input, shape index: {}]
  %s11 = inlined_call_operand.vmem [shape: f32[256,128], index: 11, kind: input, shape index: {}]
  %s12 = inlined_call_operand.vmem [shape: f32[1,128], index: 12, kind: input, shape index: {}]
  %s13 = inlined_call_operand.hbm [shape: f32[2,8,128], index: 13, kind: output, shape index: {}]
  %s14 = sld [smem:[#allocation0]]
  $region85: #{mixer_forward.1} parent=0
    _
  %s16 = ssub.s32 1, %s14
  %s17 = scalar_select 0, %s16, %s14
  $region1: #{mixer_forward.1} parent=0
    #allocation2 [shape = 'u8[8192]{0}', space=vmem, size = 0x2000, scoped, tag = 'output window, operand 0']
    #allocation3 [shape = 's32[2]{0}', space=sflag, size = 0x8, scoped, tag = 'scoped memory for mixer_forward.1']
    %18 = vsyncpa [#allocation3], 0
    %s19 = scalar_lea.sflag [#allocation3], 1
    %20 = vsyncpa %s19, 0
    loop: start=0, step=1, limit=4
    $region2: #{mixer_forward.1} parent=1 // loop_pre_header
      _
    $region3: #{mixer_forward.1} parent=1 // loop_header
      %s22 = sphi 0, %s26
      %p23 = scmp.ge.s32.totalorder %s22, 4
      %s32 = sphi 0, %s34
      %s35 = sphi 0, %s32
      %s36 = sphi 0, %s35
      %s52 = sphi 0, %s36
      %s56 = sphi 0, %s56
      %s58 = sphi 0, %s56
      %s59 = sphi 0, %s58
      %s73 = sphi 0, %s59
      %s77 = sphi 0, %s77
      %s79 = sphi 0, %s77
      %s80 = sphi 0, %s79
      %s94 = sphi 0, %s80
      %s98 = sphi 0, %s98
      %s100 = sphi 0, %s98
      %s101 = sphi 0, %s100
      %s115 = sphi 0, %s101
      %s119 = sphi 0, %s119
      %s121 = sphi 0, %s119
      %s122 = sphi 0, %s121
      %s136 = sphi 0, %s122
      %s140 = sphi 0, %s140
      %s142 = sphi 0, %s140
      %s143 = sphi 0, %s142
      %s157 = sphi 0, %s143
      %s161 = sphi 0, %s161
      %s163 = sphi 0, %s161
      %s164 = sphi 0, %s163
      %s178 = sphi 0, %s164
      %s182 = sphi 0, %s182
      %s184 = sphi 0, %s182
      %s185 = sphi 0, %s184
      %s199 = sphi 0, %s185
      %s203 = sphi 0, %s203
      %s205 = sphi 0, %s203
      %s206 = sphi 0, %s205
      %s220 = sphi 0, %s206
      %s224 = sphi 0, %s224
      %s226 = sphi 0, %s224
      %s227 = sphi 0, %s226
      %s241 = sphi 0, %s227
      %s245 = sphi 0, %s245
      %s247 = sphi 0, %s245
      %s248 = sphi 0, %s247
      %s262 = sphi 0, %s248
      %s266 = sphi 0, %s266
      %s268 = sphi 0, %s266
      %s269 = sphi 0, %s268
      %s283 = sphi 0, %s269
      %s287 = sphi 0, %s287
      %s289 = sphi 0, %s287
      %s290 = sphi 0, %s289
      %s304 = sphi 0, %s290
      %s310 = sphi 0, %s312
      %s313 = sphi 0, %s310
      %s314 = sphi 0, %s313
      %s330 = sphi 0, %s314
    $region4: #{mixer_forward.1} parent=1 // loop_header_branch
      %25 = sbr.rel (%p23) target = $region8
    $region5: #{mixer_forward.1} parent=1 // loop_body
      %s27 = ssub.s32 %s22, 1
      %s28 = ssub.s32 %s22, 2
      %s29 = sadd.s32 %s22, 1
      %s30 = ssub.s32 %s22, %s29
      %p31 = scmp.eq.s32.totalorder %s30, 0
      %s33 = sadd.s32 %s32, 1
      %s34 = scalar_select %p31, %s32, %s33
      %p37 = pneg %p31
      %p38 = scmp.eq.s32.totalorder %s22, 1
      %p39 = por %p37, %p38
      %p40 = scmp.ne.s32.totalorder %s32, %s35
      %p41 = scmp.eq.s32.totalorder %s22, 0
      %p42 = por %p40, %p41
      %p43 = scmp.ne.s32.totalorder %s32, %s35
      %p44 = scmp.eq.s32.totalorder %s27, 1
      %p45 = por %p43, %p44
      %p46 = scmp.ne.s32.totalorder %s35, %s36
      %p47 = scmp.eq.s32.totalorder %s27, 0
      %p48 = por %p46, %p47
      %p49 = scmp.ne.s32.totalorder %s35, %s36
      %p50 = scmp.eq.s32.totalorder %s28, 1
      %p51 = por %p49, %p50
      %p53 = scmp.ne.s32.totalorder %s36, %s52
      %p54 = scmp.eq.s32.totalorder %s28, 0
      %p55 = por %p53, %p54
      %s57 = sadd.s32 %s56, 1
      %p60 = scmp.eq.s32.totalorder %s22, 1
      %p61 = scmp.ne.s32.totalorder %s56, %s58
      %p62 = scmp.eq.s32.totalorder %s22, 0
      %p63 = por %p61, %p62
      %p64 = scmp.ne.s32.totalorder %s56, %s58
      %p65 = scmp.eq.s32.totalorder %s27, 1
      %p66 = por %p64, %p65
      %p67 = scmp.ne.s32.totalorder %s58, %s59
      %p68 = scmp.eq.s32.totalorder %s27, 0
      %p69 = por %p67, %p68
      %p70 = scmp.ne.s32.totalorder %s58, %s59
      %p71 = scmp.eq.s32.totalorder %s28, 1
      %p72 = por %p70, %p71
      %p74 = scmp.ne.s32.totalorder %s59, %s73
      %p75 = scmp.eq.s32.totalorder %s28, 0
      %p76 = por %p74, %p75
      %s78 = sadd.s32 %s77, 1
      %p81 = scmp.eq.s32.totalorder %s22, 1
      %p82 = scmp.ne.s32.totalorder %s77, %s79
      %p83 = scmp.eq.s32.totalorder %s22, 0
      %p84 = por %p82, %p83
      %p85 = scmp.ne.s32.totalorder %s77, %s79
      %p86 = scmp.eq.s32.totalorder %s27, 1
      %p87 = por %p85, %p86
      %p88 = scmp.ne.s32.totalorder %s79, %s80
      %p89 = scmp.eq.s32.totalorder %s27, 0
      %p90 = por %p88, %p89
      %p91 = scmp.ne.s32.totalorder %s79, %s80
      %p92 = scmp.eq.s32.totalorder %s28, 1
      %p93 = por %p91, %p92
      %p95 = scmp.ne.s32.totalorder %s80, %s94
      %p96 = scmp.eq.s32.totalorder %s28, 0
      %p97 = por %p95, %p96
      %s99 = sadd.s32 %s98, 1
      %p102 = scmp.eq.s32.totalorder %s22, 1
      %p103 = scmp.ne.s32.totalorder %s98, %s100
      %p104 = scmp.eq.s32.totalorder %s22, 0
      %p105 = por %p103, %p104
      %p106 = scmp.ne.s32.totalorder %s98, %s100
      %p107 = scmp.eq.s32.totalorder %s27, 1
      %p108 = por %p106, %p107
      %p109 = scmp.ne.s32.totalorder %s100, %s101
      %p110 = scmp.eq.s32.totalorder %s27, 0
      %p111 = por %p109, %p110
      %p112 = scmp.ne.s32.totalorder %s100, %s101
      %p113 = scmp.eq.s32.totalorder %s28, 1
      %p114 = por %p112, %p113
      %p116 = scmp.ne.s32.totalorder %s101, %s115
      %p117 = scmp.eq.s32.totalorder %s28, 0
      %p118 = por %p116, %p117
      %s120 = sadd.s32 %s119, 1
      %p123 = scmp.eq.s32.totalorder %s22, 1
      %p124 = scmp.ne.s32.totalorder %s119, %s121
      %p125 = scmp.eq.s32.totalorder %s22, 0
      %p126 = por %p124, %p125
      %p127 = scmp.ne.s32.totalorder %s119, %s121
      %p128 = scmp.eq.s32.totalorder %s27, 1
      %p129 = por %p127, %p128
      %p130 = scmp.ne.s32.totalorder %s121, %s122
      %p131 = scmp.eq.s32.totalorder %s27, 0
      %p132 = por %p130, %p131
      %p133 = scmp.ne.s32.totalorder %s121, %s122
      %p134 = scmp.eq.s32.totalorder %s28, 1
      %p135 = por %p133, %p134
      %p137 = scmp.ne.s32.totalorder %s122, %s136
      %p138 = scmp.eq.s32.totalorder %s28, 0
      %p139 = por %p137, %p138
      %s141 = sadd.s32 %s140, 1
      %p144 = scmp.eq.s32.totalorder %s22, 1
      %p145 = scmp.ne.s32.totalorder %s140, %s142
      %p146 = scmp.eq.s32.totalorder %s22, 0
      %p147 = por %p145, %p146
      %p148 = scmp.ne.s32.totalorder %s140, %s142
      %p149 = scmp.eq.s32.totalorder %s27, 1
      %p150 = por %p148, %p149
      %p151 = scmp.ne.s32.totalorder %s142, %s143
      %p152 = scmp.eq.s32.totalorder %s27, 0
      %p153 = por %p151, %p152
      %p154 = scmp.ne.s32.totalorder %s142, %s143
      %p155 = scmp.eq.s32.totalorder %s28, 1
      %p156 = por %p154, %p155
      %p158 = scmp.ne.s32.totalorder %s143, %s157
      %p159 = scmp.eq.s32.totalorder %s28, 0
      %p160 = por %p158, %p159
      %s162 = sadd.s32 %s161, 1
      %p165 = scmp.eq.s32.totalorder %s22, 1
      %p166 = scmp.ne.s32.totalorder %s161, %s163
      %p167 = scmp.eq.s32.totalorder %s22, 0
      %p168 = por %p166, %p167
      %p169 = scmp.ne.s32.totalorder %s161, %s163
      %p170 = scmp.eq.s32.totalorder %s27, 1
      %p171 = por %p169, %p170
      %p172 = scmp.ne.s32.totalorder %s163, %s164
      %p173 = scmp.eq.s32.totalorder %s27, 0
      %p174 = por %p172, %p173
      %p175 = scmp.ne.s32.totalorder %s163, %s164
      %p176 = scmp.eq.s32.totalorder %s28, 1
      %p177 = por %p175, %p176
      %p179 = scmp.ne.s32.totalorder %s164, %s178
      %p180 = scmp.eq.s32.totalorder %s28, 0
      %p181 = por %p179, %p180
      %s183 = sadd.s32 %s182, 1
      %p186 = scmp.eq.s32.totalorder %s22, 1
      %p187 = scmp.ne.s32.totalorder %s182, %s184
      %p188 = scmp.eq.s32.totalorder %s22, 0
      %p189 = por %p187, %p188
      %p190 = scmp.ne.s32.totalorder %s182, %s184
      %p191 = scmp.eq.s32.totalorder %s27, 1
      %p192 = por %p190, %p191
      %p193 = scmp.ne.s32.totalorder %s184, %s185
      %p194 = scmp.eq.s32.totalorder %s27, 0
      %p195 = por %p193, %p194
      %p196 = scmp.ne.s32.totalorder %s184, %s185
      %p197 = scmp.eq.s32.totalorder %s28, 1
      %p198 = por %p196, %p197
      %p200 = scmp.ne.s32.totalorder %s185, %s199
      %p201 = scmp.eq.s32.totalorder %s28, 0
      %p202 = por %p200, %p201
      %s204 = sadd.s32 %s203, 1
      %p207 = scmp.eq.s32.totalorder %s22, 1
      %p208 = scmp.ne.s32.totalorder %s203, %s205
      %p209 = scmp.eq.s32.totalorder %s22, 0
      %p210 = por %p208, %p209
      %p211 = scmp.ne.s32.totalorder %s203, %s205
      %p212 = scmp.eq.s32.totalorder %s27, 1
      %p213 = por %p211, %p212
      %p214 = scmp.ne.s32.totalorder %s205, %s206
      %p215 = scmp.eq.s32.totalorder %s27, 0
      %p216 = por %p214, %p215
      %p217 = scmp.ne.s32.totalorder %s205, %s206
      %p218 = scmp.eq.s32.totalorder %s28, 1
      %p219 = por %p217, %p218
      %p221 = scmp.ne.s32.totalorder %s206, %s220
      %p222 = scmp.eq.s32.totalorder %s28, 0
      %p223 = por %p221, %p222
      %s225 = sadd.s32 %s224, 1
      %p228 = scmp.eq.s32.totalorder %s22, 1
      %p229 = scmp.ne.s32.totalorder %s224, %s226
      %p230 = scmp.eq.s32.totalorder %s22, 0
      %p231 = por %p229, %p230
      %p232 = scmp.ne.s32.totalorder %s224, %s226
      %p233 = scmp.eq.s32.totalorder %s27, 1
      %p234 = por %p232, %p233
      %p235 = scmp.ne.s32.totalorder %s226, %s227
      %p236 = scmp.eq.s32.totalorder %s27, 0
      %p237 = por %p235, %p236
      %p238 = scmp.ne.s32.totalorder %s226, %s227
      %p239 = scmp.eq.s32.totalorder %s28, 1
      %p240 = por %p238, %p239
      %p242 = scmp.ne.s32.totalorder %s227, %s241
      %p243 = scmp.eq.s32.totalorder %s28, 0
      %p244 = por %p242, %p243
      %s246 = sadd.s32 %s245, 1
      %p249 = scmp.eq.s32.totalorder %s22, 1
      %p250 = scmp.ne.s32.totalorder %s245, %s247
      %p251 = scmp.eq.s32.totalorder %s22, 0
      %p252 = por %p250, %p251
      %p253 = scmp.ne.s32.totalorder %s245, %s247
      %p254 = scmp.eq.s32.totalorder %s27, 1
      %p255 = por %p253, %p254
      %p256 = scmp.ne.s32.totalorder %s247, %s248
      %p257 = scmp.eq.s32.totalorder %s27, 0
      %p258 = por %p256, %p257
      %p259 = scmp.ne.s32.totalorder %s247, %s248
      %p260 = scmp.eq.s32.totalorder %s28, 1
      %p261 = por %p259, %p260
      %p263 = scmp.ne.s32.totalorder %s248, %s262
      %p264 = scmp.eq.s32.totalorder %s28, 0
      %p265 = por %p263, %p264
      %s267 = sadd.s32 %s266, 1
      %p270 = scmp.eq.s32.totalorder %s22, 1
      %p271 = scmp.ne.s32.totalorder %s266, %s268
      %p272 = scmp.eq.s32.totalorder %s22, 0
      %p273 = por %p271, %p272
      %p274 = scmp.ne.s32.totalorder %s266, %s268
      %p275 = scmp.eq.s32.totalorder %s27, 1
      %p276 = por %p274, %p275
      %p277 = scmp.ne.s32.totalorder %s268, %s269
      %p278 = scmp.eq.s32.totalorder %s27, 0
      %p279 = por %p277, %p278
      %p280 = scmp.ne.s32.totalorder %s268, %s269
      %p281 = scmp.eq.s32.totalorder %s28, 1
      %p282 = por %p280, %p281
      %p284 = scmp.ne.s32.totalorder %s269, %s283
      %p285 = scmp.eq.s32.totalorder %s28, 0
      %p286 = por %p284, %p285
      %s288 = sadd.s32 %s287, 1
      %p291 = scmp.eq.s32.totalorder %s22, 1
      %p292 = scmp.ne.s32.totalorder %s287, %s289
      %p293 = scmp.eq.s32.totalorder %s22, 0
      %p294 = por %p292, %p293
      %p295 = scmp.ne.s32.totalorder %s287, %s289
      %p296 = scmp.eq.s32.totalorder %s27, 1
      %p297 = por %p295, %p296
      %p298 = scmp.ne.s32.totalorder %s289, %s290
      %p299 = scmp.eq.s32.totalorder %s27, 0
      %p300 = por %p298, %p299
      %p301 = scmp.ne.s32.totalorder %s289, %s290
      %p302 = scmp.eq.s32.totalorder %s28, 1
      %p303 = por %p301, %p302
      %p305 = scmp.ne.s32.totalorder %s290, %s304
      %p306 = scmp.eq.s32.totalorder %s28, 0
      %p307 = por %p305, %p306
      %s308 = ssub.s32 %s22, %s29
      %p309 = scmp.eq.s32.totalorder %s308, 0
      %s311 = sadd.s32 %s310, 1
      %s312 = scalar_select %p309, %s310, %s311
      %p315 = pneg %p309
      %p316 = scmp.eq.s32.totalorder %s22, 1
      %p317 = por %p315, %p316
      %p318 = scmp.ne.s32.totalorder %s310, %s313
      %p319 = scmp.eq.s32.totalorder %s22, 0
      %p320 = por %p318, %p319
      %p321 = scmp.ne.s32.totalorder %s310, %s313
      %p322 = scmp.eq.s32.totalorder %s27, 1
      %p323 = por %p321, %p322
      %p324 = scmp.ne.s32.totalorder %s313, %s314
      %p325 = scmp.eq.s32.totalorder %s27, 0
      %p326 = por %p324, %p325
      %p327 = scmp.ne.s32.totalorder %s313, %s314
      %p328 = scmp.eq.s32.totalorder %s28, 1
      %p329 = por %p327, %p328
      %p331 = scmp.ne.s32.totalorder %s314, %s330
      %p332 = scmp.eq.s32.totalorder %s28, 0
      %p333 = por %p331, %p332
      %p334 = scmp.le.s32.totalorder 1, %s22
      %p335 = scmp.lt.s32.totalorder %s22, 3
      %p336 = pnand %p334, %p335
      %p337 = pneg %p336
      // Predicated region
      $region9: #{mixer_forward.1} parent=5 // pred_check
        _
      $region10: #{mixer_forward.1} parent=5 // pred_check_branch
        %339 = sbr.rel (%p336) target = $region12
      $region11: #{mixer_forward.1} parent=5 // pred_region
        %s340 = ssub.s32 %s22, 1
        // Predicated region
        $region13: #{mixer_forward.1} parent=11 // pred_check
          %p341 = pneg %p69
        $region14: #{mixer_forward.1} parent=11 // pred_check_branch
          %343 = sbr.rel (%p341) target = $region16
        $region15: #{mixer_forward.1} parent=11 // pred_region
          _
        $region16: #{mixer_forward.1} parent=11 // pred_fallthru
          _
        // Predicated region
        $region17: #{mixer_forward.1} parent=11 // pred_check
          %p344 = pneg %p90
        $region18: #{mixer_forward.1} parent=11 // pred_check_branch
          %346 = sbr.rel (%p344) target = $region20
        $region19: #{mixer_forward.1} parent=11 // pred_region
          _
        $region20: #{mixer_forward.1} parent=11 // pred_fallthru
          _
        // Predicated region
        $region21: #{mixer_forward.1} parent=11 // pred_check
          %p347 = pneg %p111
        $region22: #{mixer_forward.1} parent=11 // pred_check_branch
          %349 = sbr.rel (%p347) target = $region24
        $region23: #{mixer_forward.1} parent=11 // pred_region
          _
        $region24: #{mixer_forward.1} parent=11 // pred_fallthru
          _
        // Predicated region
        $region25: #{mixer_forward.1} parent=11 // pred_check
          %p350 = pneg %p132
        $region26: #{mixer_forward.1} parent=11 // pred_check_branch
          %352 = sbr.rel (%p350) target = $region28
        $region27: #{mixer_forward.1} parent=11 // pred_region
          _
        $region28: #{mixer_forward.1} parent=11 // pred_fallthru
          _
        // Predicated region
        $region29: #{mixer_forward.1} parent=11 // pred_check
          %p353 = pneg %p153
        $region30: #{mixer_forward.1} parent=11 // pred_check_branch
          %355 = sbr.rel (%p353) target = $region32
        $region31: #{mixer_forward.1} parent=11 // pred_region
          _
        $region32: #{mixer_forward.1} parent=11 // pred_fallthru
          _
        // Predicated region
        $region33: #{mixer_forward.1} parent=11 // pred_check
          %p356 = pneg %p174
        $region34: #{mixer_forward.1} parent=11 // pred_check_branch
          %358 = sbr.rel (%p356) target = $region36
        $region35: #{mixer_forward.1} parent=11 // pred_region
          _
        $region36: #{mixer_forward.1} parent=11 // pred_fallthru
          _
        // Predicated region
        $region37: #{mixer_forward.1} parent=11 // pred_check
          %p359 = pneg %p195
        $region38: #{mixer_forward.1} parent=11 // pred_check_branch
          %361 = sbr.rel (%p359) target = $region40
        $region39: #{mixer_forward.1} parent=11 // pred_region
          _
        $region40: #{mixer_forward.1} parent=11 // pred_fallthru
          _
        // Predicated region
        $region41: #{mixer_forward.1} parent=11 // pred_check
          %p362 = pneg %p216
        $region42: #{mixer_forward.1} parent=11 // pred_check_branch
          %364 = sbr.rel (%p362) target = $region44
        $region43: #{mixer_forward.1} parent=11 // pred_region
          _
        $region44: #{mixer_forward.1} parent=11 // pred_fallthru
          _
        // Predicated region
        $region45: #{mixer_forward.1} parent=11 // pred_check
          %p365 = pneg %p237
        $region46: #{mixer_forward.1} parent=11 // pred_check_branch
          %367 = sbr.rel (%p365) target = $region48
        $region47: #{mixer_forward.1} parent=11 // pred_region
          _
        $region48: #{mixer_forward.1} parent=11 // pred_fallthru
          _
        // Predicated region
        $region49: #{mixer_forward.1} parent=11 // pred_check
          %p368 = pneg %p258
        $region50: #{mixer_forward.1} parent=11 // pred_check_branch
          %370 = sbr.rel (%p368) target = $region52
        $region51: #{mixer_forward.1} parent=11 // pred_region
          _
        $region52: #{mixer_forward.1} parent=11 // pred_fallthru
          _
        // Predicated region
        $region53: #{mixer_forward.1} parent=11 // pred_check
          %p371 = pneg %p279
        $region54: #{mixer_forward.1} parent=11 // pred_check_branch
          %373 = sbr.rel (%p371) target = $region56
        $region55: #{mixer_forward.1} parent=11 // pred_region
          _
        $region56: #{mixer_forward.1} parent=11 // pred_fallthru
          _
        // Predicated region
        $region57: #{mixer_forward.1} parent=11 // pred_check
          %p374 = pneg %p300
        $region58: #{mixer_forward.1} parent=11 // pred_check_branch
          %376 = sbr.rel (%p374) target = $region60
        $region59: #{mixer_forward.1} parent=11 // pred_region
          _
        $region60: #{mixer_forward.1} parent=11 // pred_fallthru
          _
      $region12: #{mixer_forward.1} parent=5 // pred_fallthru
        _
      %p377 = scmp.lt.s32.totalorder %s22, 2
      // Predicated region
      $region61: #{mixer_forward.1} parent=5 // pred_check
        %p378 = pneg %p377
      $region62: #{mixer_forward.1} parent=5 // pred_check_branch
        %380 = sbr.rel (%p378) target = $region64
      $region63: #{mixer_forward.1} parent=5 // pred_region
        // Predicated region
        $region65: #{mixer_forward.1} parent=63 // pred_check
          %p381 = pneg %p42
        $region66: #{mixer_forward.1} parent=63 // pred_check_branch
          %383 = sbr.rel (%p381) target = $region68
        $region67: #{mixer_forward.1} parent=63 // pred_region
          %p384 = scmp.lt.s32.totalorder %s22, 1
          %s385 = scalar_select %p384, %s22, 1
          %s386 = smul.addr %s385, 8
          %s387 = scalar_lea.vmem %s0, %s386
        $region68: #{mixer_forward.1} parent=63 // pred_fallthru
          _
      $region64: #{mixer_forward.1} parent=5 // pred_fallthru
        _
      %p388 = scmp.le.s32.totalorder 1, %s22
      %p389 = scmp.lt.s32.totalorder %s22, 3
      %p390 = pnand %p388, %p389
      %p391 = pneg %p390
      // Predicated region
      $region69: #{mixer_forward.1} parent=5 // pred_check
        _
      $region70: #{mixer_forward.1} parent=5 // pred_check_branch
        %393 = sbr.rel (%p390) target = $region72
      $region71: #{mixer_forward.1} parent=5 // pred_region
        %s394 = ssub.s32 %s22, 1
        %p395 = scmp.lt.s32.totalorder %s27, 1
        %s396 = scalar_select %p395, %s27, 1
        %s397 = smul.addr %s396, 8
        %s398 = scalar_lea.vmem %s0, %s397
        %p399 = pneg %p48
        %p400 = pneg %p45
        %p401 = pneg %p69
        %p402 = pneg %p66
        %p403 = pneg %p90
        %p404 = pneg %p87
        %p405 = pneg %p111
        %p406 = pneg %p108
        %p407 = pneg %p132
        %p408 = pneg %p129
        %p409 = pneg %p153
        %p410 = pneg %p150
        %p411 = pneg %p174
        %p412 = pneg %p171
        %p413 = pneg %p195
        %p414 = pneg %p192
        %p415 = pneg %p216
        %p416 = pneg %p213
        %p417 = pneg %p237
        %p418 = pneg %p234
        %p419 = pneg %p258
        %p420 = pneg %p255
        %p421 = pneg %p279
        %p422 = pneg %p276
        %p423 = pneg %p300
        %p424 = pneg %p297
        %p425 = pneg %p326
        %p426 = pneg %p323
        %s427 = sand.u32 %s313, 1
        %s428 = scalar_lea.sflag [#allocation3], %s427
        %s429 = sand.u32 %s313, 1
        %s430 = smul.addr %s429, 8
        %s431 = scalar_lea.vmem [#allocation2], %s430
        %p432 = scmp.lt.s32.totalorder %s27, 1
        %s433 = scalar_select %p432, %s27, 1
        %s434 = smul.addr %s433, 8
        %s435 = scalar_lea.vmem %s0, %s434
        %v436 = vld [vmem:[%s435] sm:$0xff]
        %v437 = vld [vmem:[%s1] sm:$0x1]
        %v438 = vld [vmem:[%s2] sm:$0x1]
        %439 = vadd.xlane.f32.xlu0 %v436
        %v440 = vpop.xlane.xlu0 %439
        %v441 = vrcp.pop 128.0
        %v442 = vmul.f32 %v440, %v441
        %v443 = vsub.f32 %v436, %v442
        %v444 = vmul.f32 %v443, %v443
        %445 = vadd.xlane.f32.xlu0 %v444
        %v446 = vpop.xlane.xlu0 %445
        %v447 = vmul.f32 %v446, %v441
        %v448 = vadd.f32 %v447, 1e-06
        %v449 = vrsqrt.pop %v448
        %v450 = vmul.f32 %v443, %v449
        %v452 = vlaneseq
        %v453 = vshrl.u32 %v452, 7
        %v454 = vsub.s32 0, %v453
        %v455 = vrot.slane %v437, %v454
        %v457 = vmul.f32 %v450, %v455
        %v459 = vlaneseq
        %v460 = vshrl.u32 %v459, 7
        %v461 = vsub.s32 0, %v460
        %v462 = vrot.slane %v438, %v461
        %v464 = vadd.f32 %v457, %v462
        %v465 = vld [vmem:[%s5] sm:$0xff]
        %v466 = vld [vmem:[%s5 + $0x8] sm:$0xff]
        %v467 = vld [vmem:[%s5 + $0x10] sm:$0xff]
        %v468 = vld [vmem:[%s5 + $0x18] sm:$0xff]
        %v469 = vld [vmem:[%s5 + $0x20] sm:$0xff]
        %v470 = vld [vmem:[%s5 + $0x28] sm:$0xff]
        %v471 = vld [vmem:[%s5 + $0x30] sm:$0xff]
        %v472 = vld [vmem:[%s5 + $0x38] sm:$0xff]
        %v473 = vld [vmem:[%s5 + $0x40] sm:$0xff]
        %v474 = vld [vmem:[%s5 + $0x48] sm:$0xff]
        %v475 = vld [vmem:[%s5 + $0x50] sm:$0xff]
        %v476 = vld [vmem:[%s5 + $0x58] sm:$0xff]
        %v477 = vld [vmem:[%s5 + $0x60] sm:$0xff]
        %v478 = vld [vmem:[%s5 + $0x68] sm:$0xff]
        %v479 = vld [vmem:[%s5 + $0x70] sm:$0xff]
        %v480 = vld [vmem:[%s5 + $0x78] sm:$0xff]
        %v481 = vld [vmem:[%s6] sm:$0xff]
        %v482 = vld [vmem:[%s6 + $0x8] sm:$0xff]
        %v483 = vld [vmem:[%s6 + $0x10] sm:$0xff]
        %v484 = vld [vmem:[%s6 + $0x18] sm:$0xff]
        %v485 = vld [vmem:[%s6 + $0x20] sm:$0xff]
        %v486 = vld [vmem:[%s6 + $0x28] sm:$0xff]
        %v487 = vld [vmem:[%s6 + $0x30] sm:$0xff]
        %v488 = vld [vmem:[%s6 + $0x38] sm:$0xff]
        %v489 = vld [vmem:[%s6 + $0x40] sm:$0xff]
        %v490 = vld [vmem:[%s6 + $0x48] sm:$0xff]
        %v491 = vld [vmem:[%s6 + $0x50] sm:$0xff]
        %v492 = vld [vmem:[%s6 + $0x58] sm:$0xff]
        %v493 = vld [vmem:[%s6 + $0x60] sm:$0xff]
        %v494 = vld [vmem:[%s6 + $0x68] sm:$0xff]
        %v495 = vld [vmem:[%s6 + $0x70] sm:$0xff]
        %v496 = vld [vmem:[%s6 + $0x78] sm:$0xff]
        %498 = vset.pattern.permute.xlu0 0
        %499 = vperm.xlu0 %498, %v481
        %v500 = vpop.permute.xlu0 %499
        %503 = vset.pattern.permute.xlu0 0
        %504 = vperm.xlu0 %503, %v482
        %v505 = vpop.permute.xlu0 %504
        %508 = vset.pattern.permute.xlu0 0
        %509 = vperm.xlu0 %508, %v483
        %v510 = vpop.permute.xlu0 %509
        %513 = vset.pattern.permute.xlu0 0
        %514 = vperm.xlu0 %513, %v484
        %v515 = vpop.permute.xlu0 %514
        %518 = vset.pattern.permute.xlu0 0
        %519 = vperm.xlu0 %518, %v485
        %v520 = vpop.permute.xlu0 %519
        %523 = vset.pattern.permute.xlu0 0
        %524 = vperm.xlu0 %523, %v486
        %v525 = vpop.permute.xlu0 %524
        %528 = vset.pattern.permute.xlu0 0
        %529 = vperm.xlu0 %528, %v487
        %v530 = vpop.permute.xlu0 %529
        %533 = vset.pattern.permute.xlu0 0
        %534 = vperm.xlu0 %533, %v488
        %v535 = vpop.permute.xlu0 %534
        %538 = vset.pattern.permute.xlu0 0
        %539 = vperm.xlu0 %538, %v489
        %v540 = vpop.permute.xlu0 %539
        %543 = vset.pattern.permute.xlu0 0
        %544 = vperm.xlu0 %543, %v490
        %v545 = vpop.permute.xlu0 %544
        %548 = vset.pattern.permute.xlu0 0
        %549 = vperm.xlu0 %548, %v491
        %v550 = vpop.permute.xlu0 %549
        %553 = vset.pattern.permute.xlu0 0
        %554 = vperm.xlu0 %553, %v492
        %v555 = vpop.permute.xlu0 %554
        %558 = vset.pattern.permute.xlu0 0
        %559 = vperm.xlu0 %558, %v493
        %v560 = vpop.permute.xlu0 %559
        %563 = vset.pattern.permute.xlu0 0
        %564 = vperm.xlu0 %563, %v494
        %v565 = vpop.permute.xlu0 %564
        %568 = vset.pattern.permute.xlu0 0
        %569 = vperm.xlu0 %568, %v495
        %v570 = vpop.permute.xlu0 %569
        %573 = vset.pattern.permute.xlu0 0
        %574 = vperm.xlu0 %573, %v496
        %v575 = vpop.permute.xlu0 %574
        %vm577 = vcmask 64512
        %v579 = vsel %vm577, %v465, 0
        %v582 = vsel %vm577, %v466, 0
        %v585 = vsel %vm577, %v467, 0
        %v588 = vsel %vm577, %v468, 0
        %v591 = vsel %vm577, %v469, 0
        %v594 = vsel %vm577, %v470, 0
        %v597 = vsel %vm577, %v471, 0
        %v600 = vsel %vm577, %v472, 0
        %v603 = vsel %vm577, %v473, 0
        %v606 = vsel %vm577, %v474, 0
        %v609 = vsel %vm577, %v475, 0
        %v612 = vsel %vm577, %v476, 0
        %v615 = vsel %vm577, %v477, 0
        %v618 = vsel %vm577, %v478, 0
        %v621 = vsel %vm577, %v479, 0
        %v624 = vsel %vm577, %v480, 0
        %626 = vmatprep.subr.mxu0 0.0
        %627 = vmatpush1.msra.mxu0 0.0
        %628 = vmatprep.subr.mxu0 0.0
        %629 = vmatpush1.msra.mxu0 0.0
        %630 = vmatprep.subr.mxu0 0.0
        %631 = vmatpush1.msra.mxu0 0.0
        %632 = vmatprep.subr.mxu0 0.0
        %633 = vmatpush1.msra.mxu0 0.0
        %634 = vmatprep.subr.mxu0 0.0
        %635 = vmatpush1.msra.mxu0 0.0
        %636 = vmatprep.subr.mxu0 0.0
        %637 = vmatpush1.msra.mxu0 0.0
        %638 = vmatprep.subr.mxu0 0.0
        %639 = vmatpush1.msra.mxu0 0.0
        %640 = vmatprep.subr.mxu0 0.0
        %641 = vmatpush1.msra.mxu0 0.0
        %642 = vmatprep.subr.mxu0 0.0
        %643 = vmatpush1.msra.mxu0 0.0
        %644 = vmatprep.subr.mxu0 0.0
        %645 = vmatpush1.msra.mxu0 0.0
        %646 = vmatprep.subr.mxu0 0.0
        %647 = vmatpush1.msra.mxu0 0.0
        %648 = vmatprep.subr.mxu0 0.0
        %649 = vmatpush1.msra.mxu0 0.0
        %650 = vmatprep.subr.mxu0 0.0
        %651 = vmatpush1.msra.mxu0 0.0
        %652 = vmatprep.subr.mxu0 0.0
        %653 = vmatpush1.msra.mxu0 0.0
        %654 = vmatprep.subr.mxu0 0.0
        %655 = vmatpush1.msra.mxu0 0.0
        %656 = vmatprep.subr.mxu0 0.0
        %657 = vmatpush1.msra.mxu0 %v464
        %658 = vmatprep.subr.mxu0 0.0
        %659 = vmatpush2.msra.mxu0 0.0
        %660 = vmatprep.subr.mxu0 0.0
        %661 = vmatpush2.msra.mxu0 0.0
        %662 = vmatprep.subr.mxu0 0.0
        %663 = vmatpush2.msra.mxu0 0.0
        %664 = vmatprep.subr.mxu0 0.0
        %665 = vmatpush2.msra.mxu0 0.0
        %666 = vmatprep.subr.mxu0 0.0
        %667 = vmatpush2.msra.mxu0 0.0
        %668 = vmatprep.subr.mxu0 0.0
        %669 = vmatpush2.msra.mxu0 0.0
        %670 = vmatprep.subr.mxu0 0.0
        %671 = vmatpush2.msra.mxu0 0.0
        %672 = vmatprep.subr.mxu0 0.0
        %673 = vmatpush2.msra.mxu0 0.0
        %674 = vmatprep.subr.mxu0 0.0
        %675 = vmatpush2.msra.mxu0 0.0
        %676 = vmatprep.subr.mxu0 0.0
        %677 = vmatpush2.msra.mxu0 0.0
        %678 = vmatprep.subr.mxu0 0.0
        %679 = vmatpush2.msra.mxu0 0.0
        %680 = vmatprep.subr.mxu0 0.0
        %681 = vmatpush2.msra.mxu0 0.0
        %682 = vmatprep.subr.mxu0 0.0
        %683 = vmatpush2.msra.mxu0 0.0
        %684 = vmatprep.subr.mxu0 0.0
        %685 = vmatpush2.msra.mxu0 0.0
        %686 = vmatprep.subr.mxu0 0.0
        %687 = vmatpush2.msra.mxu0 0.0
        %688 = vmatprep.subr.mxu0 0.0
        %689 = vmatpush2.msra.mxu0 0.0
        %690 = vmatprep.mubr.f32.mxu0 0.0
        %691 = vmatmul.mubr.f32.gmra.mxu0 %v579
        %v692 = vpop.f32.mrf.mxu0
        %v693 = vadd.f32 %v500, %v692
        %v694 = vpop.f32.mrf.mxu0
        %695 = vmatprep.mubr.f32.mxu0 0.0
        %696 = vmatmul.mubr.f32.gmra.mxu0 %v582
        %v697 = vpop.f32.mrf.mxu0
        %v698 = vadd.f32 %v505, %v697
        %v699 = vpop.f32.mrf.mxu0
        %700 = vmatprep.mubr.f32.mxu0 0.0
        %701 = vmatmul.mubr.f32.gmra.mxu0 %v585
        %v702 = vpop.f32.mrf.mxu0
        %v703 = vadd.f32 %v510, %v702
        %v704 = vpop.f32.mrf.mxu0
        %705 = vmatprep.mubr.f32.mxu0 0.0
        %706 = vmatmul.mubr.f32.gmra.mxu0 %v588
        %v707 = vpop.f32.mrf.mxu0
        %v708 = vadd.f32 %v515, %v707
        %v709 = vpop.f32.mrf.mxu0
        %710 = vmatprep.mubr.f32.mxu0 0.0
        %711 = vmatmul.mubr.f32.gmra.mxu0 %v591
        %v712 = vpop.f32.mrf.mxu0
        %v713 = vadd.f32 %v520, %v712
        %v714 = vpop.f32.mrf.mxu0
        %715 = vmatprep.mubr.f32.mxu0 0.0
        %716 = vmatmul.mubr.f32.gmra.mxu0 %v594
        %v717 = vpop.f32.mrf.mxu0
        %v718 = vadd.f32 %v525, %v717
        %v719 = vpop.f32.mrf.mxu0
        %720 = vmatprep.mubr.f32.mxu0 0.0
        %721 = vmatmul.mubr.f32.gmra.mxu0 %v597
        %v722 = vpop.f32.mrf.mxu0
        %v723 = vadd.f32 %v530, %v722
        %v724 = vpop.f32.mrf.mxu0
        %725 = vmatprep.mubr.f32.mxu0 0.0
        %726 = vmatmul.mubr.f32.gmra.mxu0 %v600
        %v727 = vpop.f32.mrf.mxu0
        %v728 = vadd.f32 %v535, %v727
        %v729 = vpop.f32.mrf.mxu0
        %730 = vmatprep.mubr.f32.mxu0 0.0
        %731 = vmatmul.mubr.f32.gmra.mxu0 %v603
        %v732 = vpop.f32.mrf.mxu0
        %v733 = vadd.f32 %v540, %v732
        %v734 = vpop.f32.mrf.mxu0
        %735 = vmatprep.mubr.f32.mxu0 0.0
        %736 = vmatmul.mubr.f32.gmra.mxu0 %v606
        %v737 = vpop.f32.mrf.mxu0
        %v738 = vadd.f32 %v545, %v737
        %v739 = vpop.f32.mrf.mxu0
        %740 = vmatprep.mubr.f32.mxu0 0.0
        %741 = vmatmul.mubr.f32.gmra.mxu0 %v609
        %v742 = vpop.f32.mrf.mxu0
        %v743 = vadd.f32 %v550, %v742
        %v744 = vpop.f32.mrf.mxu0
        %745 = vmatprep.mubr.f32.mxu0 0.0
        %746 = vmatmul.mubr.f32.gmra.mxu0 %v612
        %v747 = vpop.f32.mrf.mxu0
        %v748 = vadd.f32 %v555, %v747
        %v749 = vpop.f32.mrf.mxu0
        %750 = vmatprep.mubr.f32.mxu0 0.0
        %751 = vmatmul.mubr.f32.gmra.mxu0 %v615
        %v752 = vpop.f32.mrf.mxu0
        %v753 = vadd.f32 %v560, %v752
        %v754 = vpop.f32.mrf.mxu0
        %755 = vmatprep.mubr.f32.mxu0 0.0
        %756 = vmatmul.mubr.f32.gmra.mxu0 %v618
        %v757 = vpop.f32.mrf.mxu0
        %v758 = vadd.f32 %v565, %v757
        %v759 = vpop.f32.mrf.mxu0
        %760 = vmatprep.mubr.f32.mxu0 0.0
        %761 = vmatmul.mubr.f32.gmra.mxu0 %v621
        %v762 = vpop.f32.mrf.mxu0
        %v763 = vadd.f32 %v570, %v762
        %v764 = vpop.f32.mrf.mxu0
        %765 = vmatprep.mubr.f32.mxu0 0.0
        %766 = vmatmul.mubr.f32.gmra.mxu0 %v624
        %v767 = vpop.f32.mrf.mxu0
        %v768 = vadd.f32 %v575, %v767
        %v769 = vpop.f32.mrf.mxu0
        %770 = vdwg.mxu0
        %v771 = vmul.f32 %v693, 0.5
        %v772 = vmul.f32 %v698, 0.5
        %v773 = vmul.f32 %v703, 0.5
        %v774 = vmul.f32 %v708, 0.5
        %v775 = vmul.f32 %v713, 0.5
        %v776 = vmul.f32 %v718, 0.5
        %v777 = vmul.f32 %v723, 0.5
        %v778 = vmul.f32 %v728, 0.5
        %v779 = vmul.f32 %v733, 0.5
        %v780 = vmul.f32 %v738, 0.5
        %v781 = vmul.f32 %v743, 0.5
        %v782 = vmul.f32 %v748, 0.5
        %v783 = vmul.f32 %v753, 0.5
        %v784 = vmul.f32 %v758, 0.5
        %v785 = vmul.f32 %v763, 0.5
        %v786 = vmul.f32 %v768, 0.5
        %v787 = vmul.f32 %v693, 0.70710677
        %v788 = vmul.f32 %v698, 0.70710677
        %v789 = vmul.f32 %v703, 0.70710677
        %v790 = vmul.f32 %v708, 0.70710677
        %v791 = vmul.f32 %v713, 0.70710677
        %v792 = vmul.f32 %v718, 0.70710677
        %v793 = vmul.f32 %v723, 0.70710677
        %v794 = vmul.f32 %v728, 0.70710677
        %v795 = vmul.f32 %v733, 0.70710677
        %v796 = vmul.f32 %v738, 0.70710677
        %v797 = vmul.f32 %v743, 0.70710677
        %v798 = vmul.f32 %v748, 0.70710677
        %v799 = vmul.f32 %v753, 0.70710677
        %v800 = vmul.f32 %v758, 0.70710677
        %v801 = vmul.f32 %v763, 0.70710677
        %v802 = vmul.f32 %v768, 0.70710677
        %vm803 = vcmp.ge.f32.partialorder %v787, 0.0
        %vm804 = vcmp.ge.f32.partialorder %v788, 0.0
        %vm805 = vcmp.ge.f32.partialorder %v789, 0.0
        %vm806 = vcmp.ge.f32.partialorder %v790, 0.0
        %vm807 = vcmp.ge.f32.partialorder %v791, 0.0
        %vm808 = vcmp.ge.f32.partialorder %v792, 0.0
        %vm809 = vcmp.ge.f32.partialorder %v793, 0.0
        %vm810 = vcmp.ge.f32.partialorder %v794, 0.0
        %vm811 = vcmp.ge.f32.partialorder %v795, 0.0
        %vm812 = vcmp.ge.f32.partialorder %v796, 0.0
        %vm813 = vcmp.ge.f32.partialorder %v797, 0.0
        %vm814 = vcmp.ge.f32.partialorder %v798, 0.0
        %vm815 = vcmp.ge.f32.partialorder %v799, 0.0
        %vm816 = vcmp.ge.f32.partialorder %v800, 0.0
        %vm817 = vcmp.ge.f32.partialorder %v801, 0.0
        %vm818 = vcmp.ge.f32.partialorder %v802, 0.0
        %v819 = vsel %vm803, 1.0, -1.0
        %v820 = vsel %vm804, 1.0, -1.0
        %v821 = vsel %vm805, 1.0, -1.0
        %v822 = vsel %vm806, 1.0, -1.0
        %v823 = vsel %vm807, 1.0, -1.0
        %v824 = vsel %vm808, 1.0, -1.0
        %v825 = vsel %vm809, 1.0, -1.0
        %v826 = vsel %vm810, 1.0, -1.0
        %v827 = vsel %vm811, 1.0, -1.0
        %v828 = vsel %vm812, 1.0, -1.0
        %v829 = vsel %vm813, 1.0, -1.0
        %v830 = vsel %vm814, 1.0, -1.0
        %v831 = vsel %vm815, 1.0, -1.0
        %v832 = vsel %vm816, 1.0, -1.0
        %v833 = vsel %vm817, 1.0, -1.0
        %v834 = vsel %vm818, 1.0, -1.0
        %v835 = vmul.f32 %v787, %v819
        %v836 = vmul.f32 %v788, %v820
        %v837 = vmul.f32 %v789, %v821
        %v838 = vmul.f32 %v790, %v822
        %v839 = vmul.f32 %v791, %v823
        %v840 = vmul.f32 %v792, %v824
        %v841 = vmul.f32 %v793, %v825
        %v842 = vmul.f32 %v794, %v826
        %v843 = vmul.f32 %v795, %v827
        %v844 = vmul.f32 %v796, %v828
        %v845 = vmul.f32 %v797, %v829
        %v846 = vmul.f32 %v798, %v830
        %v847 = vmul.f32 %v799, %v831
        %v848 = vmul.f32 %v800, %v832
        %v849 = vmul.f32 %v801, %v833
        %v850 = vmul.f32 %v802, %v834
        %v851 = vmul.f32 %v835, 0.3275911
        %v852 = vmul.f32 %v836, 0.3275911
        %v853 = vmul.f32 %v837, 0.3275911
        %v854 = vmul.f32 %v838, 0.3275911
        %v855 = vmul.f32 %v839, 0.3275911
        %v856 = vmul.f32 %v840, 0.3275911
        %v857 = vmul.f32 %v841, 0.3275911
        %v858 = vmul.f32 %v842, 0.3275911
        %v859 = vmul.f32 %v843, 0.3275911
        %v860 = vmul.f32 %v844, 0.3275911
        %v861 = vmul.f32 %v845, 0.3275911
        %v862 = vmul.f32 %v846, 0.3275911
        %v863 = vmul.f32 %v847, 0.3275911
        %v864 = vmul.f32 %v848, 0.3275911
        %v865 = vmul.f32 %v849, 0.3275911
        %v866 = vmul.f32 %v850, 0.3275911
        %v867 = vadd.f32 %v851, 1.0
        %v868 = vadd.f32 %v852, 1.0
        %v869 = vadd.f32 %v853, 1.0
        %v870 = vadd.f32 %v854, 1.0
        %v871 = vadd.f32 %v855, 1.0
        %v872 = vadd.f32 %v856, 1.0
        %v873 = vadd.f32 %v857, 1.0
        %v874 = vadd.f32 %v858, 1.0
        %v875 = vadd.f32 %v859, 1.0
        %v876 = vadd.f32 %v860, 1.0
        %v877 = vadd.f32 %v861, 1.0
        %v878 = vadd.f32 %v862, 1.0
        %v879 = vadd.f32 %v863, 1.0
        %v880 = vadd.f32 %v864, 1.0
        %v881 = vadd.f32 %v865, 1.0
        %v882 = vadd.f32 %v866, 1.0
        %v883 = vrcp.pop %v867
        %v884 = vmul.f32 1.0, %v883
        %v885 = vrcp.pop %v868
        %v886 = vmul.f32 1.0, %v885
        %v887 = vrcp.pop %v869
        %v888 = vmul.f32 1.0, %v887
        %v889 = vrcp.pop %v870
        %v890 = vmul.f32 1.0, %v889
        %v891 = vrcp.pop %v871
        %v892 = vmul.f32 1.0, %v891
        %v893 = vrcp.pop %v872
        %v894 = vmul.f32 1.0, %v893
        %v895 = vrcp.pop %v873
        %v896 = vmul.f32 1.0, %v895
        %v897 = vrcp.pop %v874
        %v898 = vmul.f32 1.0, %v897
        %v899 = vrcp.pop %v875
        %v900 = vmul.f32 1.0, %v899
        %v901 = vrcp.pop %v876
        %v902 = vmul.f32 1.0, %v901
        %v903 = vrcp.pop %v877
        %v904 = vmul.f32 1.0, %v903
        %v905 = vrcp.pop %v878
        %v906 = vmul.f32 1.0, %v905
        %v907 = vrcp.pop %v879
        %v908 = vmul.f32 1.0, %v907
        %v909 = vrcp.pop %v880
        %v910 = vmul.f32 1.0, %v909
        %v911 = vrcp.pop %v881
        %v912 = vmul.f32 1.0, %v911
        %v913 = vrcp.pop %v882
        %v914 = vmul.f32 1.0, %v913
        %v915 = vmul.f32 %v884, 1.0614054
        %v916 = vmul.f32 %v886, 1.0614054
        %v917 = vmul.f32 %v888, 1.0614054
        %v918 = vmul.f32 %v890, 1.0614054
        %v919 = vmul.f32 %v892, 1.0614054
        %v920 = vmul.f32 %v894, 1.0614054
        %v921 = vmul.f32 %v896, 1.0614054
        %v922 = vmul.f32 %v898, 1.0614054
        %v923 = vmul.f32 %v900, 1.0614054
        %v924 = vmul.f32 %v902, 1.0614054
        %v925 = vmul.f32 %v904, 1.0614054
        %v926 = vmul.f32 %v906, 1.0614054
        %v927 = vmul.f32 %v908, 1.0614054
        %v928 = vmul.f32 %v910, 1.0614054
        %v929 = vmul.f32 %v912, 1.0614054
        %v930 = vmul.f32 %v914, 1.0614054
        %v931 = vadd.f32 %v915, -1.4531521
        %v932 = vadd.f32 %v916, -1.4531521
        %v933 = vadd.f32 %v917, -1.4531521
        %v934 = vadd.f32 %v918, -1.4531521
        %v935 = vadd.f32 %v919, -1.4531521
        %v936 = vadd.f32 %v920, -1.4531521
        %v937 = vadd.f32 %v921, -1.4531521
        %v938 = vadd.f32 %v922, -1.4531521
        %v939 = vadd.f32 %v923, -1.4531521
        %v940 = vadd.f32 %v924, -1.4531521
        %v941 = vadd.f32 %v925, -1.4531521
        %v942 = vadd.f32 %v926, -1.4531521
        %v943 = vadd.f32 %v927, -1.4531521
        %v944 = vadd.f32 %v928, -1.4531521
        %v945 = vadd.f32 %v929, -1.4531521
        %v946 = vadd.f32 %v930, -1.4531521
        %v947 = vmul.f32 %v884, %v931
        %v948 = vmul.f32 %v886, %v932
        %v949 = vmul.f32 %v888, %v933
        %v950 = vmul.f32 %v890, %v934
        %v951 = vmul.f32 %v892, %v935
        %v952 = vmul.f32 %v894, %v936
        %v953 = vmul.f32 %v896, %v937
        %v954 = vmul.f32 %v898, %v938
        %v955 = vmul.f32 %v900, %v939
        %v956 = vmul.f32 %v902, %v940
        %v957 = vmul.f32 %v904, %v941
        %v958 = vmul.f32 %v906, %v942
        %v959 = vmul.f32 %v908, %v943
        %v960 = vmul.f32 %v910, %v944
        %v961 = vmul.f32 %v912, %v945
        %v962 = vmul.f32 %v914, %v946
        %v963 = vadd.f32 %v947, 1.4214138
        %v964 = vadd.f32 %v948, 1.4214138
        %v965 = vadd.f32 %v949, 1.4214138
        %v966 = vadd.f32 %v950, 1.4214138
        %v967 = vadd.f32 %v951, 1.4214138
        %v968 = vadd.f32 %v952, 1.4214138
        %v969 = vadd.f32 %v953, 1.4214138
        %v970 = vadd.f32 %v954, 1.4214138
        %v971 = vadd.f32 %v955, 1.4214138
        %v972 = vadd.f32 %v956, 1.4214138
        %v973 = vadd.f32 %v957, 1.4214138
        %v974 = vadd.f32 %v958, 1.4214138
        %v975 = vadd.f32 %v959, 1.4214138
        %v976 = vadd.f32 %v960, 1.4214138
        %v977 = vadd.f32 %v961, 1.4214138
        %v978 = vadd.f32 %v962, 1.4214138
        %v979 = vmul.f32 %v884, %v963
        %v980 = vmul.f32 %v886, %v964
        %v981 = vmul.f32 %v888, %v965
        %v982 = vmul.f32 %v890, %v966
        %v983 = vmul.f32 %v892, %v967
        %v984 = vmul.f32 %v894, %v968
        %v985 = vmul.f32 %v896, %v969
        %v986 = vmul.f32 %v898, %v970
        %v987 = vmul.f32 %v900, %v971
        %v988 = vmul.f32 %v902, %v972
        %v989 = vmul.f32 %v904, %v973
        %v990 = vmul.f32 %v906, %v974
        %v991 = vmul.f32 %v908, %v975
        %v992 = vmul.f32 %v910, %v976
        %v993 = vmul.f32 %v912, %v977
        %v994 = vmul.f32 %v914, %v978
        %v995 = vadd.f32 %v979, -0.28449672
        %v996 = vadd.f32 %v980, -0.28449672
        %v997 = vadd.f32 %v981, -0.28449672
        %v998 = vadd.f32 %v982, -0.28449672
        %v999 = vadd.f32 %v983, -0.28449672
        %v1000 = vadd.f32 %v984, -0.28449672
        %v1001 = vadd.f32 %v985, -0.28449672
        %v1002 = vadd.f32 %v986, -0.28449672
        %v1003 = vadd.f32 %v987, -0.28449672
        %v1004 = vadd.f32 %v988, -0.28449672
        %v1005 = vadd.f32 %v989, -0.28449672
        %v1006 = vadd.f32 %v990, -0.28449672
        %v1007 = vadd.f32 %v991, -0.28449672
        %v1008 = vadd.f32 %v992, -0.28449672
        %v1009 = vadd.f32 %v993, -0.28449672
        %v1010 = vadd.f32 %v994, -0.28449672
        %v1011 = vmul.f32 %v884, %v995
        %v1012 = vmul.f32 %v886, %v996
        %v1013 = vmul.f32 %v888, %v997
        %v1014 = vmul.f32 %v890, %v998
        %v1015 = vmul.f32 %v892, %v999
        %v1016 = vmul.f32 %v894, %v1000
        %v1017 = vmul.f32 %v896, %v1001
        %v1018 = vmul.f32 %v898, %v1002
        %v1019 = vmul.f32 %v900, %v1003
        %v1020 = vmul.f32 %v902, %v1004
        %v1021 = vmul.f32 %v904, %v1005
        %v1022 = vmul.f32 %v906, %v1006
        %v1023 = vmul.f32 %v908, %v1007
        %v1024 = vmul.f32 %v910, %v1008
        %v1025 = vmul.f32 %v912, %v1009
        %v1026 = vmul.f32 %v914, %v1010
        %v1027 = vadd.f32 %v1011, 0.2548296
        %v1028 = vadd.f32 %v1012, 0.2548296
        %v1029 = vadd.f32 %v1013, 0.2548296
        %v1030 = vadd.f32 %v1014, 0.2548296
        %v1031 = vadd.f32 %v1015, 0.2548296
        %v1032 = vadd.f32 %v1016, 0.2548296
        %v1033 = vadd.f32 %v1017, 0.2548296
        %v1034 = vadd.f32 %v1018, 0.2548296
        %v1035 = vadd.f32 %v1019, 0.2548296
        %v1036 = vadd.f32 %v1020, 0.2548296
        %v1037 = vadd.f32 %v1021, 0.2548296
        %v1038 = vadd.f32 %v1022, 0.2548296
        %v1039 = vadd.f32 %v1023, 0.2548296
        %v1040 = vadd.f32 %v1024, 0.2548296
        %v1041 = vadd.f32 %v1025, 0.2548296
        %v1042 = vadd.f32 %v1026, 0.2548296
        %v1043 = vmul.f32 %v884, %v1027
        %v1044 = vmul.f32 %v886, %v1028
        %v1045 = vmul.f32 %v888, %v1029
        %v1046 = vmul.f32 %v890, %v1030
        %v1047 = vmul.f32 %v892, %v1031
        %v1048 = vmul.f32 %v894, %v1032
        %v1049 = vmul.f32 %v896, %v1033
        %v1050 = vmul.f32 %v898, %v1034
        %v1051 = vmul.f32 %v900, %v1035
        %v1052 = vmul.f32 %v902, %v1036
        %v1053 = vmul.f32 %v904, %v1037
        %v1054 = vmul.f32 %v906, %v1038
        %v1055 = vmul.f32 %v908, %v1039
        %v1056 = vmul.f32 %v910, %v1040
        %v1057 = vmul.f32 %v912, %v1041
        %v1058 = vmul.f32 %v914, %v1042
        %v1059 = vsub.f32 0.0, %v835
        %v1060 = vsub.f32 0.0, %v836
        %v1061 = vsub.f32 0.0, %v837
        %v1062 = vsub.f32 0.0, %v838
        %v1063 = vsub.f32 0.0, %v839
        %v1064 = vsub.f32 0.0, %v840
        %v1065 = vsub.f32 0.0, %v841
        %v1066 = vsub.f32 0.0, %v842
        %v1067 = vsub.f32 0.0, %v843
        %v1068 = vsub.f32 0.0, %v844
        %v1069 = vsub.f32 0.0, %v845
        %v1070 = vsub.f32 0.0, %v846
        %v1071 = vsub.f32 0.0, %v847
        %v1072 = vsub.f32 0.0, %v848
        %v1073 = vsub.f32 0.0, %v849
        %v1074 = vsub.f32 0.0, %v850
        %v1075 = vmul.f32 %v1059, %v835
        %v1076 = vmul.f32 %v1060, %v836
        %v1077 = vmul.f32 %v1061, %v837
        %v1078 = vmul.f32 %v1062, %v838
        %v1079 = vmul.f32 %v1063, %v839
        %v1080 = vmul.f32 %v1064, %v840
        %v1081 = vmul.f32 %v1065, %v841
        %v1082 = vmul.f32 %v1066, %v842
        %v1083 = vmul.f32 %v1067, %v843
        %v1084 = vmul.f32 %v1068, %v844
        %v1085 = vmul.f32 %v1069, %v845
        %v1086 = vmul.f32 %v1070, %v846
        %v1087 = vmul.f32 %v1071, %v847
        %v1088 = vmul.f32 %v1072, %v848
        %v1089 = vmul.f32 %v1073, %v849
        %v1090 = vmul.f32 %v1074, %v850
        %v1091 = vmul.f32 %v1075, 1.442695
        %v1092 = vpow.pop %v1091
        %v1093 = vmul.f32 %v1076, 1.442695
        %v1094 = vpow.pop %v1093
        %v1095 = vmul.f32 %v1077, 1.442695
        %v1096 = vpow.pop %v1095
        %v1097 = vmul.f32 %v1078, 1.442695
        %v1098 = vpow.pop %v1097
        %v1099 = vmul.f32 %v1079, 1.442695
        %v1100 = vpow.pop %v1099
        %v1101 = vmul.f32 %v1080, 1.442695
        %v1102 = vpow.pop %v1101
        %v1103 = vmul.f32 %v1081, 1.442695
        %v1104 = vpow.pop %v1103
        %v1105 = vmul.f32 %v1082, 1.442695
        %v1106 = vpow.pop %v1105
        %v1107 = vmul.f32 %v1083, 1.442695
        %v1108 = vpow.pop %v1107
        %v1109 = vmul.f32 %v1084, 1.442695
        %v1110 = vpow.pop %v1109
        %v1111 = vmul.f32 %v1085, 1.442695
        %v1112 = vpow.pop %v1111
        %v1113 = vmul.f32 %v1086, 1.442695
        %v1114 = vpow.pop %v1113
        %v1115 = vmul.f32 %v1087, 1.442695
        %v1116 = vpow.pop %v1115
        %v1117 = vmul.f32 %v1088, 1.442695
        %v1118 = vpow.pop %v1117
        %v1119 = vmul.f32 %v1089, 1.442695
        %v1120 = vpow.pop %v1119
        %v1121 = vmul.f32 %v1090, 1.442695
        %v1122 = vpow.pop %v1121
        %v1123 = vmul.f32 %v1043, %v1092
        %v1124 = vmul.f32 %v1044, %v1094
        %v1125 = vmul.f32 %v1045, %v1096
        %v1126 = vmul.f32 %v1046, %v1098
        %v1127 = vmul.f32 %v1047, %v1100
        %v1128 = vmul.f32 %v1048, %v1102
        %v1129 = vmul.f32 %v1049, %v1104
        %v1130 = vmul.f32 %v1050, %v1106
        %v1131 = vmul.f32 %v1051, %v1108
        %v1132 = vmul.f32 %v1052, %v1110
        %v1133 = vmul.f32 %v1053, %v1112
        %v1134 = vmul.f32 %v1054, %v1114
        %v1135 = vmul.f32 %v1055, %v1116
        %v1136 = vmul.f32 %v1056, %v1118
        %v1137 = vmul.f32 %v1057, %v1120
        %v1138 = vmul.f32 %v1058, %v1122
        %v1139 = vsub.f32 1.0, %v1123
        %v1140 = vsub.f32 1.0, %v1124
        %v1141 = vsub.f32 1.0, %v1125
        %v1142 = vsub.f32 1.0, %v1126
        %v1143 = vsub.f32 1.0, %v1127
        %v1144 = vsub.f32 1.0, %v1128
        %v1145 = vsub.f32 1.0, %v1129
        %v1146 = vsub.f32 1.0, %v1130
        %v1147 = vsub.f32 1.0, %v1131
        %v1148 = vsub.f32 1.0, %v1132
        %v1149 = vsub.f32 1.0, %v1133
        %v1150 = vsub.f32 1.0, %v1134
        %v1151 = vsub.f32 1.0, %v1135
        %v1152 = vsub.f32 1.0, %v1136
        %v1153 = vsub.f32 1.0, %v1137
        %v1154 = vsub.f32 1.0, %v1138
        %v1155 = vmul.f32 %v819, %v1139
        %v1156 = vmul.f32 %v820, %v1140
        %v1157 = vmul.f32 %v821, %v1141
        %v1158 = vmul.f32 %v822, %v1142
        %v1159 = vmul.f32 %v823, %v1143
        %v1160 = vmul.f32 %v824, %v1144
        %v1161 = vmul.f32 %v825, %v1145
        %v1162 = vmul.f32 %v826, %v1146
        %v1163 = vmul.f32 %v827, %v1147
        %v1164 = vmul.f32 %v828, %v1148
        %v1165 = vmul.f32 %v829, %v1149
        %v1166 = vmul.f32 %v830, %v1150
        %v1167 = vmul.f32 %v831, %v1151
        %v1168 = vmul.f32 %v832, %v1152
        %v1169 = vmul.f32 %v833, %v1153
        %v1170 = vmul.f32 %v834, %v1154
        %v1171 = vadd.f32 %v1155, 1.0
        %v1172 = vadd.f32 %v1156, 1.0
        %v1173 = vadd.f32 %v1157, 1.0
        %v1174 = vadd.f32 %v1158, 1.0
        %v1175 = vadd.f32 %v1159, 1.0
        %v1176 = vadd.f32 %v1160, 1.0
        %v1177 = vadd.f32 %v1161, 1.0
        %v1178 = vadd.f32 %v1162, 1.0
        %v1179 = vadd.f32 %v1163, 1.0
        %v1180 = vadd.f32 %v1164, 1.0
        %v1181 = vadd.f32 %v1165, 1.0
        %v1182 = vadd.f32 %v1166, 1.0
        %v1183 = vadd.f32 %v1167, 1.0
        %v1184 = vadd.f32 %v1168, 1.0
        %v1185 = vadd.f32 %v1169, 1.0
        %v1186 = vadd.f32 %v1170, 1.0
        %v1187 = vmul.f32 %v771, %v1171
        %v1188 = vmul.f32 %v772, %v1172
        %v1189 = vmul.f32 %v773, %v1173
        %v1190 = vmul.f32 %v774, %v1174
        %v1191 = vmul.f32 %v775, %v1175
        %v1192 = vmul.f32 %v776, %v1176
        %v1193 = vmul.f32 %v777, %v1177
        %v1194 = vmul.f32 %v778, %v1178
        %v1195 = vmul.f32 %v779, %v1179
        %v1196 = vmul.f32 %v780, %v1180
        %v1197 = vmul.f32 %v781, %v1181
        %v1198 = vmul.f32 %v782, %v1182
        %v1199 = vmul.f32 %v783, %v1183
        %v1200 = vmul.f32 %v784, %v1184
        %v1201 = vmul.f32 %v785, %v1185
        %v1202 = vmul.f32 %v786, %v1186
        %v1203 = vld [vmem:[%s7] sm:$0xff]
        %v1204 = vld [vmem:[%s8] sm:$0xff]
        %1206 = vset.pattern.permute.xlu0 0
        %1207 = vperm.xlu0 %1206, %v1204
        %v1208 = vpop.permute.xlu0 %1207
        %1210 = vmatprep.subr.mxu0 0.0
        %1211 = vmatpush1.msra.mxu0 %v1202
        %1212 = vmatprep.subr.mxu0 0.0
        %1213 = vmatpush1.msra.mxu0 %v1201
        %1214 = vmatprep.subr.mxu0 0.0
        %1215 = vmatpush1.msra.mxu0 %v1200
        %1216 = vmatprep.subr.mxu0 0.0
        %1217 = vmatpush1.msra.mxu0 %v1199
        %1218 = vmatprep.subr.mxu0 0.0
        %1219 = vmatpush1.msra.mxu0 %v1198
        %1220 = vmatprep.subr.mxu0 0.0
        %1221 = vmatpush1.msra.mxu0 %v1197
        %1222 = vmatprep.subr.mxu0 0.0
        %1223 = vmatpush1.msra.mxu0 %v1196
        %1224 = vmatprep.subr.mxu0 0.0
        %1225 = vmatpush1.msra.mxu0 %v1195
        %1226 = vmatprep.subr.mxu0 0.0
        %1227 = vmatpush1.msra.mxu0 %v1194
        %1228 = vmatprep.subr.mxu0 0.0
        %1229 = vmatpush1.msra.mxu0 %v1193
        %1230 = vmatprep.subr.mxu0 0.0
        %1231 = vmatpush1.msra.mxu0 %v1192
        %1232 = vmatprep.subr.mxu0 0.0
        %1233 = vmatpush1.msra.mxu0 %v1191
        %1234 = vmatprep.subr.mxu0 0.0
        %1235 = vmatpush1.msra.mxu0 %v1190
        %1236 = vmatprep.subr.mxu0 0.0
        %1237 = vmatpush1.msra.mxu0 %v1189
        %1238 = vmatprep.subr.mxu0 0.0
        %1239 = vmatpush1.msra.mxu0 %v1188
        %1240 = vmatprep.subr.mxu0 0.0
        %1241 = vmatpush1.msra.mxu0 %v1187
        %1242 = vmatprep.subr.mxu0 0.0
        %1243 = vmatpush2.msra.mxu0 0.0
        %1244 = vmatprep.subr.mxu0 0.0
        %1245 = vmatpush2.msra.mxu0 0.0
        %1246 = vmatprep.subr.mxu0 0.0
        %1247 = vmatpush2.msra.mxu0 0.0
        %1248 = vmatprep.subr.mxu0 0.0
        %1249 = vmatpush2.msra.mxu0 0.0
        %1250 = vmatprep.subr.mxu0 0.0
        %1251 = vmatpush2.msra.mxu0 0.0
        %1252 = vmatprep.subr.mxu0 0.0
        %1253 = vmatpush2.msra.mxu0 0.0
        %1254 = vmatprep.subr.mxu0 0.0
        %1255 = vmatpush2.msra.mxu0 0.0
        %1256 = vmatprep.subr.mxu0 0.0
        %1257 = vmatpush2.msra.mxu0 0.0
        %1258 = vmatprep.subr.mxu0 0.0
        %1259 = vmatpush2.msra.mxu0 0.0
        %1260 = vmatprep.subr.mxu0 0.0
        %1261 = vmatpush2.msra.mxu0 0.0
        %1262 = vmatprep.subr.mxu0 0.0
        %1263 = vmatpush2.msra.mxu0 0.0
        %1264 = vmatprep.subr.mxu0 0.0
        %1265 = vmatpush2.msra.mxu0 0.0
        %1266 = vmatprep.subr.mxu0 0.0
        %1267 = vmatpush2.msra.mxu0 0.0
        %1268 = vmatprep.subr.mxu0 0.0
        %1269 = vmatpush2.msra.mxu0 0.0
        %1270 = vmatprep.subr.mxu0 0.0
        %1271 = vmatpush2.msra.mxu0 0.0
        %1272 = vmatprep.subr.mxu0 0.0
        %1273 = vmatpush2.msra.mxu0 0.0
        %1274 = vmatprep.mubr.f32.mxu0 0.0
        %1275 = vmatmul.mubr.f32.gmra.mxu0 %v1203
        %v1276 = vpop.f32.mrf.mxu0
        %v1277 = vadd.f32 %v1208, %v1276
        %v1278 = vpop.f32.mrf.mxu0
        %1279 = vdwg.mxu0
        %v1280 = vadd.f32 %v436, %v1277
        %v1281 = vld [vmem:[%s3] sm:$0x1]
        %v1282 = vld [vmem:[%s4] sm:$0x1]
        %1283 = vadd.xlane.f32.xlu0 %v1280
        %v1284 = vpop.xlane.xlu0 %1283
        %v1285 = vmul.f32 %v1284, %v441
        %v1286 = vsub.f32 %v1280, %v1285
        %v1287 = vmul.f32 %v1286, %v1286
        %1288 = vadd.xlane.f32.xlu0 %v1287
        %v1289 = vpop.xlane.xlu0 %1288
        %v1290 = vmul.f32 %v1289, %v441
        %v1291 = vadd.f32 %v1290, 1e-06
        %v1292 = vrsqrt.pop %v1291
        %v1293 = vmul.f32 %v1286, %v1292
        %v1295 = vlaneseq
        %v1296 = vshrl.u32 %v1295, 7
        %v1297 = vsub.s32 0, %v1296
        %v1298 = vrot.slane %v1281, %v1297
        %v1300 = vmul.f32 %v1293, %v1298
        %v1302 = vlaneseq
        %v1303 = vshrl.u32 %v1302, 7
        %v1304 = vsub.s32 0, %v1303
        %v1305 = vrot.slane %v1282, %v1304
        %v1307 = vadd.f32 %v1300, %v1305
        %v1308 = vld [vmem:[%s9] sm:$0xff]
        %v1309 = vld [vmem:[%s9 + $0x8] sm:$0xff]
        %v1310 = vld [vmem:[%s9 + $0x10] sm:$0xff]
        %v1311 = vld [vmem:[%s9 + $0x18] sm:$0xff]
        %v1312 = vld [vmem:[%s9 + $0x20] sm:$0xff]
        %v1313 = vld [vmem:[%s9 + $0x28] sm:$0xff]
        %v1314 = vld [vmem:[%s9 + $0x30] sm:$0xff]
        %v1315 = vld [vmem:[%s9 + $0x38] sm:$0xff]
        %v1316 = vld [vmem:[%s9 + $0x40] sm:$0xff]
        %v1317 = vld [vmem:[%s9 + $0x48] sm:$0xff]
        %v1318 = vld [vmem:[%s9 + $0x50] sm:$0xff]
        %v1319 = vld [vmem:[%s9 + $0x58] sm:$0xff]
        %v1320 = vld [vmem:[%s9 + $0x60] sm:$0xff]
        %v1321 = vld [vmem:[%s9 + $0x68] sm:$0xff]
        %v1322 = vld [vmem:[%s9 + $0x70] sm:$0xff]
        %v1323 = vld [vmem:[%s9 + $0x78] sm:$0xff]
        %v1324 = vld [vmem:[%s9 + $0x80] sm:$0xff]
        %v1325 = vld [vmem:[%s9 + $0x88] sm:$0xff]
        %v1326 = vld [vmem:[%s9 + $0x90] sm:$0xff]
        %v1327 = vld [vmem:[%s9 + $0x98] sm:$0xff]
        %v1328 = vld [vmem:[%s9 + $0xa0] sm:$0xff]
        %v1329 = vld [vmem:[%s9 + $0xa8] sm:$0xff]
        %v1330 = vld [vmem:[%s9 + $0xb0] sm:$0xff]
        %v1331 = vld [vmem:[%s9 + $0xb8] sm:$0xff]
        %v1332 = vld [vmem:[%s9 + $0xc0] sm:$0xff]
        %v1333 = vld [vmem:[%s9 + $0xc8] sm:$0xff]
        %v1334 = vld [vmem:[%s9 + $0xd0] sm:$0xff]
        %v1335 = vld [vmem:[%s9 + $0xd8] sm:$0xff]
        %v1336 = vld [vmem:[%s9 + $0xe0] sm:$0xff]
        %v1337 = vld [vmem:[%s9 + $0xe8] sm:$0xff]
        %v1338 = vld [vmem:[%s9 + $0xf0] sm:$0xff]
        %v1339 = vld [vmem:[%s9 + $0xf8] sm:$0xff]
        %v1340 = vld [vmem:[%s10] sm:$0x3]
        %v1342 = vlaneseq
        %v1343 = vshrl.u32 %v1342, 7
        %v1344 = vsub.s32 0, %v1343
        %v1345 = vrot.slane %v1340, %v1344
        %v1346 = vlaneseq
        %v1347 = vshrl.u32 %v1346, 7
        %v1348 = vsub.s32 1, %v1347
        %v1349 = vrot.slane %v1340, %v1348
        %1352 = vmatprep.subr.mxu0 %v1339
        %1353 = vmatpush1.msra.mxu0 %v1338
        %1354 = vmatprep.subr.mxu0 %v1337
        %1355 = vmatpush1.msra.mxu0 %v1336
        %1356 = vmatprep.subr.mxu0 %v1335
        %1357 = vmatpush1.msra.mxu0 %v1334
        %1358 = vmatprep.subr.mxu0 %v1333
        %1359 = vmatpush1.msra.mxu0 %v1332
        %1360 = vmatprep.subr.mxu0 %v1331
        %1361 = vmatpush1.msra.mxu0 %v1330
        %1362 = vmatprep.subr.mxu0 %v1329
        %1363 = vmatpush1.msra.mxu0 %v1328
        %1364 = vmatprep.subr.mxu0 %v1327
        %1365 = vmatpush1.msra.mxu0 %v1326
        %1366 = vmatprep.subr.mxu0 %v1325
        %1367 = vmatpush1.msra.mxu0 %v1324
        %1368 = vmatprep.subr.mxu0 %v1323
        %1369 = vmatpush1.msra.mxu0 %v1322
        %1370 = vmatprep.subr.mxu0 %v1321
        %1371 = vmatpush1.msra.mxu0 %v1320
        %1372 = vmatprep.subr.mxu0 %v1319
        %1373 = vmatpush1.msra.mxu0 %v1318
        %1374 = vmatprep.subr.mxu0 %v1317
        %1375 = vmatpush1.msra.mxu0 %v1316
        %1376 = vmatprep.subr.mxu0 %v1315
        %1377 = vmatpush1.msra.mxu0 %v1314
        %1378 = vmatprep.subr.mxu0 %v1313
        %1379 = vmatpush1.msra.mxu0 %v1312
        %1380 = vmatprep.subr.mxu0 %v1311
        %1381 = vmatpush1.msra.mxu0 %v1310
        %1382 = vmatprep.subr.mxu0 %v1309
        %1383 = vmatpush1.msra.mxu0 %v1308
        %1384 = vmatprep.subr.mxu0 0.0
        %1385 = vmatpush2.msra.mxu0 0.0
        %1386 = vmatprep.subr.mxu0 0.0
        %1387 = vmatpush2.msra.mxu0 0.0
        %1388 = vmatprep.subr.mxu0 0.0
        %1389 = vmatpush2.msra.mxu0 0.0
        %1390 = vmatprep.subr.mxu0 0.0
        %1391 = vmatpush2.msra.mxu0 0.0
        %1392 = vmatprep.subr.mxu0 0.0
        %1393 = vmatpush2.msra.mxu0 0.0
        %1394 = vmatprep.subr.mxu0 0.0
        %1395 = vmatpush2.msra.mxu0 0.0
        %1396 = vmatprep.subr.mxu0 0.0
        %1397 = vmatpush2.msra.mxu0 0.0
        %1398 = vmatprep.subr.mxu0 0.0
        %1399 = vmatpush2.msra.mxu0 0.0
        %1400 = vmatprep.subr.mxu0 0.0
        %1401 = vmatpush2.msra.mxu0 0.0
        %1402 = vmatprep.subr.mxu0 0.0
        %1403 = vmatpush2.msra.mxu0 0.0
        %1404 = vmatprep.subr.mxu0 0.0
        %1405 = vmatpush2.msra.mxu0 0.0
        %1406 = vmatprep.subr.mxu0 0.0
        %1407 = vmatpush2.msra.mxu0 0.0
        %1408 = vmatprep.subr.mxu0 0.0
        %1409 = vmatpush2.msra.mxu0 0.0
        %1410 = vmatprep.subr.mxu0 0.0
        %1411 = vmatpush2.msra.mxu0 0.0
        %1412 = vmatprep.subr.mxu0 0.0
        %1413 = vmatpush2.msra.mxu0 0.0
        %1414 = vmatprep.subr.mxu0 0.0
        %1415 = vmatpush2.msra.mxu0 0.0
        %1416 = vmatprep.mubr.f32.mxu0 0.0
        %1417 = vmatmul.mubr.f32.gmra.mxu0 %v1307
        %v1418 = vpop.f32.mrf.mxu0
        %v1419 = vadd.f32 %v1345, %v1418
        %v1420 = vpop.f32.mrf.mxu0
        %v1421 = vadd.f32 %v1349, %v1420
        %1422 = vdwg.mxu0
        %v1423 = vmul.f32 %v1419, 0.5
        %v1424 = vmul.f32 %v1421, 0.5
        %v1425 = vmul.f32 %v1419, 0.70710677
        %v1426 = vmul.f32 %v1421, 0.70710677
        %vm1427 = vcmp.ge.f32.partialorder %v1425, 0.0
        %vm1428 = vcmp.ge.f32.partialorder %v1426, 0.0
        %v1429 = vsel %vm1427, 1.0, -1.0
        %v1430 = vsel %vm1428, 1.0, -1.0
        %v1431 = vmul.f32 %v1425, %v1429
        %v1432 = vmul.f32 %v1426, %v1430
        %v1433 = vmul.f32 %v1431, 0.3275911
        %v1434 = vmul.f32 %v1432, 0.3275911
        %v1435 = vadd.f32 %v1433, 1.0
        %v1436 = vadd.f32 %v1434, 1.0
        %v1437 = vrcp.pop %v1435
        %v1438 = vmul.f32 1.0, %v1437
        %v1439 = vrcp.pop %v1436
        %v1440 = vmul.f32 1.0, %v1439
        %v1441 = vmul.f32 %v1438, 1.0614054
        %v1442 = vmul.f32 %v1440, 1.0614054
        %v1443 = vadd.f32 %v1441, -1.4531521
        %v1444 = vadd.f32 %v1442, -1.4531521
        %v1445 = vmul.f32 %v1438, %v1443
        %v1446 = vmul.f32 %v1440, %v1444
        %v1447 = vadd.f32 %v1445, 1.4214138
        %v1448 = vadd.f32 %v1446, 1.4214138
        %v1449 = vmul.f32 %v1438, %v1447
        %v1450 = vmul.f32 %v1440, %v1448
        %v1451 = vadd.f32 %v1449, -0.28449672
        %v1452 = vadd.f32 %v1450, -0.28449672
        %v1453 = vmul.f32 %v1438, %v1451
        %v1454 = vmul.f32 %v1440, %v1452
        %v1455 = vadd.f32 %v1453, 0.2548296
        %v1456 = vadd.f32 %v1454, 0.2548296
        %v1457 = vmul.f32 %v1438, %v1455
        %v1458 = vmul.f32 %v1440, %v1456
        %v1459 = vsub.f32 0.0, %v1431
        %v1460 = vsub.f32 0.0, %v1432
        %v1461 = vmul.f32 %v1459, %v1431
        %v1462 = vmul.f32 %v1460, %v1432
        %v1463 = vmul.f32 %v1461, 1.442695
        %v1464 = vpow.pop %v1463
        %v1465 = vmul.f32 %v1462, 1.442695
        %v1466 = vpow.pop %v1465
        %v1467 = vmul.f32 %v1457, %v1464
        %v1468 = vmul.f32 %v1458, %v1466
        %v1469 = vsub.f32 1.0, %v1467
        %v1470 = vsub.f32 1.0, %v1468
        %v1471 = vmul.f32 %v1429, %v1469
        %v1472 = vmul.f32 %v1430, %v1470
        %v1473 = vadd.f32 %v1471, 1.0
        %v1474 = vadd.f32 %v1472, 1.0
        %v1475 = vmul.f32 %v1423, %v1473
        %v1476 = vmul.f32 %v1424, %v1474
        %v1477 = vld [vmem:[%s11] sm:$0xff]
        %v1478 = vld [vmem:[%s11 + $0x8] sm:$0xff]
        %v1479 = vld [vmem:[%s11 + $0x10] sm:$0xff]
        %v1480 = vld [vmem:[%s11 + $0x18] sm:$0xff]
        %v1481 = vld [vmem:[%s11 + $0x20] sm:$0xff]
        %v1482 = vld [vmem:[%s11 + $0x28] sm:$0xff]
        %v1483 = vld [vmem:[%s11 + $0x30] sm:$0xff]
        %v1484 = vld [vmem:[%s11 + $0x38] sm:$0xff]
        %v1485 = vld [vmem:[%s11 + $0x40] sm:$0xff]
        %v1486 = vld [vmem:[%s11 + $0x48] sm:$0xff]
        %v1487 = vld [vmem:[%s11 + $0x50] sm:$0xff]
        %v1488 = vld [vmem:[%s11 + $0x58] sm:$0xff]
        %v1489 = vld [vmem:[%s11 + $0x60] sm:$0xff]
        %v1490 = vld [vmem:[%s11 + $0x68] sm:$0xff]
        %v1491 = vld [vmem:[%s11 + $0x70] sm:$0xff]
        %v1492 = vld [vmem:[%s11 + $0x78] sm:$0xff]
        %v1493 = vld [vmem:[%s11 + $0x80] sm:$0xff]
        %v1494 = vld [vmem:[%s11 + $0x88] sm:$0xff]
        %v1495 = vld [vmem:[%s11 + $0x90] sm:$0xff]
        %v1496 = vld [vmem:[%s11 + $0x98] sm:$0xff]
        %v1497 = vld [vmem:[%s11 + $0xa0] sm:$0xff]
        %v1498 = vld [vmem:[%s11 + $0xa8] sm:$0xff]
        %v1499 = vld [vmem:[%s11 + $0xb0] sm:$0xff]
        %v1500 = vld [vmem:[%s11 + $0xb8] sm:$0xff]
        %v1501 = vld [vmem:[%s11 + $0xc0] sm:$0xff]
        %v1502 = vld [vmem:[%s11 + $0xc8] sm:$0xff]
        %v1503 = vld [vmem:[%s11 + $0xd0] sm:$0xff]
        %v1504 = vld [vmem:[%s11 + $0xd8] sm:$0xff]
        %v1505 = vld [vmem:[%s11 + $0xe0] sm:$0xff]
        %v1506 = vld [vmem:[%s11 + $0xe8] sm:$0xff]
        %v1507 = vld [vmem:[%s11 + $0xf0] sm:$0xff]
        %v1508 = vld [vmem:[%s11 + $0xf8] sm:$0xff]
        %v1509 = vld [vmem:[%s12] sm:$0x1]
        %v1511 = vlaneseq
        %v1512 = vshrl.u32 %v1511, 7
        %v1513 = vsub.s32 0, %v1512
        %v1514 = vrot.slane %v1509, %v1513
        %1516 = vmatprep.subr.mxu0 0.0
        %1517 = vmatpush1.msra.mxu0 %v1492
        %1518 = vmatprep.subr.mxu0 0.0
        %1519 = vmatpush1.msra.mxu0 %v1491
        %1520 = vmatprep.subr.mxu0 0.0
        %1521 = vmatpush1.msra.mxu0 %v1490
        %1522 = vmatprep.subr.mxu0 0.0
        %1523 = vmatpush1.msra.mxu0 %v1489
        %1524 = vmatprep.subr.mxu0 0.0
        %1525 = vmatpush1.msra.mxu0 %v1488
        %1526 = vmatprep.subr.mxu0 0.0
        %1527 = vmatpush1.msra.mxu0 %v1487
        %1528 = vmatprep.subr.mxu0 0.0
        %1529 = vmatpush1.msra.mxu0 %v1486
        %1530 = vmatprep.subr.mxu0 0.0
        %1531 = vmatpush1.msra.mxu0 %v1485
        %1532 = vmatprep.subr.mxu0 0.0
        %1533 = vmatpush1.msra.mxu0 %v1484
        %1534 = vmatprep.subr.mxu0 0.0
        %1535 = vmatpush1.msra.mxu0 %v1483
        %1536 = vmatprep.subr.mxu0 0.0
        %1537 = vmatpush1.msra.mxu0 %v1482
        %1538 = vmatprep.subr.mxu0 0.0
        %1539 = vmatpush1.msra.mxu0 %v1481
        %1540 = vmatprep.subr.mxu0 0.0
        %1541 = vmatpush1.msra.mxu0 %v1480
        %1542 = vmatprep.subr.mxu0 0.0
        %1543 = vmatpush1.msra.mxu0 %v1479
        %1544 = vmatprep.subr.mxu0 0.0
        %1545 = vmatpush1.msra.mxu0 %v1478
        %1546 = vmatprep.subr.mxu0 0.0
        %1547 = vmatpush1.msra.mxu0 %v1477
        %1548 = vmatprep.subr.mxu0 0.0
        %1549 = vmatpush2.msra.mxu0 %v1508
        %1550 = vmatprep.subr.mxu0 0.0
        %1551 = vmatpush2.msra.mxu0 %v1507
        %1552 = vmatprep.subr.mxu0 0.0
        %1553 = vmatpush2.msra.mxu0 %v1506
        %1554 = vmatprep.subr.mxu0 0.0
        %1555 = vmatpush2.msra.mxu0 %v1505
        %1556 = vmatprep.subr.mxu0 0.0
        %1557 = vmatpush2.msra.mxu0 %v1504
        %1558 = vmatprep.subr.mxu0 0.0
        %1559 = vmatpush2.msra.mxu0 %v1503
        %1560 = vmatprep.subr.mxu0 0.0
        %1561 = vmatpush2.msra.mxu0 %v1502
        %1562 = vmatprep.subr.mxu0 0.0
        %1563 = vmatpush2.msra.mxu0 %v1501
        %1564 = vmatprep.subr.mxu0 0.0
        %1565 = vmatpush2.msra.mxu0 %v1500
        %1566 = vmatprep.subr.mxu0 0.0
        %1567 = vmatpush2.msra.mxu0 %v1499
        %1568 = vmatprep.subr.mxu0 0.0
        %1569 = vmatpush2.msra.mxu0 %v1498
        %1570 = vmatprep.subr.mxu0 0.0
        %1571 = vmatpush2.msra.mxu0 %v1497
        %1572 = vmatprep.subr.mxu0 0.0
        %1573 = vmatpush2.msra.mxu0 %v1496
        %1574 = vmatprep.subr.mxu0 0.0
        %1575 = vmatpush2.msra.mxu0 %v1495
        %1576 = vmatprep.subr.mxu0 0.0
        %1577 = vmatpush2.msra.mxu0 %v1494
        %1578 = vmatprep.subr.mxu0 0.0
        %1579 = vmatpush2.msra.mxu0 %v1493
        %1580 = vmatprep.mubr.f32.mxu0 %v1476
        %1581 = vmatmul.mubr.f32.gmra.mxu0 %v1475
        %v1582 = vpop.f32.mrf.mxu0
        %v1583 = vadd.f32 %v1514, %v1582
        %v1584 = vpop.f32.mrf.mxu0
        %1585 = vdwg.mxu0
        %v1586 = vadd.f32 %v1280, %v1583
        %1587 = vst [vmem:[%s431] sm:$0xff] %v1586
        %s1588 = sand.u32 %s313, 1
        %s1589 = scalar_lea.sflag [#allocation3], %s1588
        %s1590 = sand.u32 %s313, 1
        %s1591 = smul.addr %s1590, 8
        %s1592 = scalar_lea.vmem [#allocation2], %s1591
        // Predicated region
        $region73: #{mixer_forward.1} parent=71 // pred_check
          %p1593 = pneg %p323
        $region74: #{mixer_forward.1} parent=71 // pred_check_branch
          %1595 = sbr.rel (%p1593) target = $region76
        $region75: #{mixer_forward.1} parent=71 // pred_region
          %s1597 = ssub.s32 128, 128
          %1598 = vsyncadd %s1589, %s1597
          %s1599 = smul.addr %s27, 128
          %s1600 = scalar_lea.hbm %s13, %s1599
          %s1602 = sshll.u32 %s1592, 4
          %s1603 = int_to_ptr.vmem [resolvable:$true] %s1602
          %1605 = dma.vmem_to_hbm [thread:$0]  %s1603, 128, %s1600, %s1589
        $region76: #{mixer_forward.1} parent=71 // pred_fallthru
          _
      $region72: #{mixer_forward.1} parent=5 // pred_fallthru
        _
      %p1606 = scmp.le.s32.totalorder 2, %s22
      // Predicated region
      $region77: #{mixer_forward.1} parent=5 // pred_check
        %p1607 = pneg %p1606
      $region78: #{mixer_forward.1} parent=5 // pred_check_branch
        %1609 = sbr.rel (%p1607) target = $region80
      $region79: #{mixer_forward.1} parent=5 // pred_region
        %s1610 = ssub.s32 %s22, 2
        // Predicated region
        $region81: #{mixer_forward.1} parent=79 // pred_check
          %p1611 = pneg %p329
        $region82: #{mixer_forward.1} parent=79 // pred_check_branch
          %1613 = sbr.rel (%p1611) target = $region84
        $region83: #{mixer_forward.1} parent=79 // pred_region
          %s1614 = sand.u32 %s314, 1
          %s1615 = scalar_lea.sflag [#allocation3], %s1614
          %s1616 = sand.u32 %s314, 1
          %s1617 = smul.addr %s1616, 8
          %s1618 = scalar_lea.vmem [#allocation2], %s1617
          %1619 = dma.done %s1615, 128
        $region84: #{mixer_forward.1} parent=79 // pred_fallthru
          _
      $region80: #{mixer_forward.1} parent=5 // pred_fallthru
        _
    $region6: #{mixer_forward.1} parent=1 // loop_footer
      %s26 = sadd.s32 1, %s22
    $region7: #{mixer_forward.1} parent=1 // loop_footer_branch
      %21 = sbr.rel target = $region3
    $region8: #{mixer_forward.1} parent=1 // loop_exit
      _
    %1620 = vsyncpa [#allocation3], 1
    %s1621 = scalar_lea.sflag [#allocation3], 1
    %1622 = vsyncpa %s1621, 1

</llo_original>
